<compile_context>
chip_gen: v7x
topology: tpu7x:2x2x1
jax: 0.10.0
libtpu: 0.0.40
codegen_flags: <defaults>
</compile_context>

<pallas_src>
import functools

import jax
import jax.numpy as jnp
from jax.experimental import pallas as pl
from jax.experimental.pallas import tpu as pltpu

STRIDE = 32       # detection stride (matches `stride = 32` in the module)
C_IN = 3          # RGB input
HIDDEN = 128      # hidden width of synthetic head
NUM_ANCHORS = 4
NUM_CLASSES = 3
OUT_PER_ANCHOR = 5 + NUM_CLASSES          # x, y, w, h, obj, classes
OUT_DIM = NUM_ANCHORS * OUT_PER_ANCHOR    # 32 real output channels
OUT_PAD = 128                             # lane-dense padded output width
TILE_M_DEFAULT = 512                      # 512*3072*2B = 3 MiB X tile (bf16)


def _cdiv(a, b):
    return -(-a // b)


def _round_up(x, m):
    return ((x + m - 1) // m) * m


def _choose_tile_m(M, tile_m):
    """Pick the M-tile: <= tile_m rows, multiple of 16 (bf16 sublane packing),
    sized so the last tile is nearly full (low padded-row waste) and, once M
    is large enough, at least 4 grid steps exist (v7x two-core sharding)."""
    tile_m = max(16, int(tile_m))
    n_tiles = max(_cdiv(M, tile_m),          # respect the per-tile cap
                  min(4, _cdiv(M, 64)))      # >= 4 steps once M >= 256
    tm = _round_up(_cdiv(M, n_tiles), 16)
    return min(tm, _round_up(M, 16))


def _det_head_kernel(x_ref, w1_ref, b1_ref, w2_ref, b2_ref, o_ref):
    # x_ref : (TM, K)     bf16 flattened stride-32 patches (pipelined tile)
    # w1_ref: (K, H)      bf16 (resident)      b1_ref: (1, H)    f32
    # w2_ref: (H, OPAD)   bf16 (resident)      b2_ref: (1, OPAD) f32
    # o_ref : (TM, OPAD)  bf16, lane-dense; real channels are [:, :OUT_DIM]
    h = jnp.dot(x_ref[...], w1_ref[...], preferred_element_type=jnp.float32)
    h = h + b1_ref[...]
    h = h * jax.nn.sigmoid(h)                                   # SiLU (f32)
    o = jnp.dot(h.astype(jnp.bfloat16), w2_ref[...],
                preferred_element_type=jnp.float32)
    o = o + b2_ref[...]
    o_ref[...] = jax.nn.sigmoid(o).astype(o_ref.dtype)          # bf16 store


def _run_det_head(x2d, w1, b1, w2, b2, tile_m):
    M, K = x2d.shape
    H = w1.shape[1]
    OPAD = w2.shape[1]

    tm = _choose_tile_m(M, tile_m)
    m_pad = _round_up(M, tm)
    if m_pad != M:
        x2d = jnp.pad(x2d, ((0, m_pad - M), (0, 0)))
    grid = (m_pad // tm,)

    cost = pl.CostEstimate(
        flops=2 * m_pad * K * H + 2 * m_pad * H * OPAD,
        transcendentals=m_pad * (H + OPAD),
        bytes_accessed=(m_pad * K * 2                 # X (bf16)
                        + K * H * 2 + H * OPAD * 2    # weights (bf16)
                        + (H + OPAD) * 4              # biases (f32)
                        + m_pad * OPAD * 2),          # output (bf16)
    )

    y = pl.pallas_call(
        _det_head_kernel,
        out_shape=jax.ShapeDtypeStruct((m_pad, OPAD), jnp.bfloat16),
        grid=grid,
        in_specs=[
            pl.BlockSpec((tm, K), lambda i: (i, 0)),       # X: pipelined tile
            pl.BlockSpec((K, H), lambda i: (0, 0)),        # W1: resident
            pl.BlockSpec((1, H), lambda i: (0, 0)),        # b1: resident
            pl.BlockSpec((H, OPAD), lambda i: (0, 0)),     # W2 (padded): resident
            pl.BlockSpec((1, OPAD), lambda i: (0, 0)),     # b2 (padded): resident
        ],
        out_specs=pl.BlockSpec((tm, OPAD), lambda i: (i, 0)),
        compiler_params=pltpu.CompilerParams(
            dimension_semantics=("parallel",),             # megacore on v7x
            vmem_limit_bytes=32 * 1024 * 1024,             # safe on v5e/v6e/v7x
        ),
        cost_estimate=cost,
    )(x2d, w1, b1, w2, b2)
    return y[:M, :OUT_DIM]


@functools.partial(jax.jit, static_argnames=("tile_m",))
def _forward_impl(im, w1, b1, w2, b2, *, tile_m):
    N, C, Hh, Ww = im.shape
    gh, gw = Hh // STRIDE, Ww // STRIDE
    # Stride-32 patch extraction (im2col). Cast to bf16 first so the fused
    # XLA transpose moves 2 B/elem, then feed the lane-dense (M, K) slab to
    # the kernel (see module TODO re: moving this fully in-kernel).
    x = im.astype(jnp.bfloat16)
    x = x.reshape(N, C, gh, STRIDE, gw, STRIDE)
    x = jnp.transpose(x, (0, 2, 4, 1, 3, 5))               # N, gh, gw, C, 32, 32
    x2d = x.reshape(N * gh * gw, C * STRIDE * STRIDE)
    y2d = _run_det_head(x2d, w1, b1, w2, b2, tile_m)
    # YOLO-style inference output: (N, num_predictions, 5 + nc), fp32 like the
    # original (`model.float()`); the cast is a tiny (M, 32) op.
    y2d = y2d.astype(jnp.float32)
    return y2d.reshape(N, gh * gw * NUM_ANCHORS, OUT_PER_ANCHOR)


class LoadTFLiteModelPallas:
    """JAX/Pallas stand-in for LoadTFLiteModel (fp16=False, stride=32)."""

    def __init__(self, key=jax.random.PRNGKey(0), tile_m=TILE_M_DEFAULT):
        self.fp16 = False
        self.stride = STRIDE
        self.tile_m = int(tile_m)
        k1, k2, k3, k4 = jax.random.split(key, 4)
        K = C_IN * STRIDE * STRIDE
        # TODO(synk): the real torch.jit.load(...) detector cannot be loaded
        # here; these deterministic synthetic weights stand in for self.model.
        w1 = (jax.random.normal(k1, (K, HIDDEN), jnp.float32)
              / jnp.sqrt(jnp.float32(K)))
        w2 = (jax.random.normal(k3, (HIDDEN, OUT_DIM), jnp.float32)
              / jnp.sqrt(jnp.float32(HIDDEN)))
        # bf16 matmul operands (f32 accumulation in-kernel); biases stay f32.
        self.w1 = w1.astype(jnp.bfloat16)
        self.b1 = jax.random.normal(k2, (1, HIDDEN), jnp.float32) * 0.01
        # Zero-pad the 32 output channels to 128 so the kernel's output tile
        # is lane-dense (unmasked full-lane stores).
        self.w2 = jnp.pad(w2, ((0, 0), (0, OUT_PAD - OUT_DIM))).astype(jnp.bfloat16)
        self.b2 = jnp.pad(
            jax.random.normal(k4, (1, OUT_DIM), jnp.float32) * 0.01,
            ((0, 0), (0, OUT_PAD - OUT_DIM)))

    def forward(self, im):
        if self.fp16 and im.dtype != jnp.float16:
            im = im.astype(jnp.float16)
        # TODO(synk): fp16 flag is always False in the wrapper (as in the
        # original); compute path uses bf16 operands with f32 accumulation.
        return _forward_impl(im, self.w1, self.b1, self.w2, self.b2,
                             tile_m=self.tile_m)

    __call__ = forward


if __name__ == "__main__":
    key = jax.random.PRNGKey(0)
    k_img, k_model = jax.random.split(key)
    # Small stride-32-consistent image: batch=2, 3x128x128 NCHW -> M=32 patches.
    im = jax.random.normal(k_img, (2, 3, 128, 128), jnp.float32)

    # tile_m=16 so the test exercises a multi-tile grid (grid=(2,)).
    model = LoadTFLiteModelPallas(k_model, tile_m=16)
    y = model(im)
    y = jax.block_until_ready(y)

    # Plain-JAX reference with the same bf16-operand / f32-accumulate math and
    # the same bf16 output rounding.
    N, C, Hh, Ww = im.shape
    gh, gw = Hh // STRIDE, Ww // STRIDE
    xr = jnp.transpose(
        im.astype(jnp.bfloat16).reshape(N, C, gh, STRIDE, gw, STRIDE),
        (0, 2, 4, 1, 3, 5)).reshape(N * gh * gw, -1)
    hr = jnp.dot(xr, model.w1, preferred_element_type=jnp.float32) + model.b1
    hr = hr * jax.nn.sigmoid(hr)
    yr = jax.nn.sigmoid(jnp.dot(hr.astype(jnp.bfloat16), model.w2,
                                preferred_element_type=jnp.float32) + model.b2)
    yr = yr[:, :OUT_DIM].astype(jnp.bfloat16).astype(jnp.float32)
    yr = yr.reshape(N, gh * gw * NUM_ANCHORS, OUT_PER_ANCHOR)

    assert y.shape == (N, gh * gw * NUM_ANCHORS, OUT_PER_ANCHOR), y.shape
    err = float(jnp.max(jnp.abs(y.astype(jnp.float32) - yr)))
    assert err < 5e-3, f"max abs err {err}"

    print("KERNEL_OK")
</pallas_src>

<mosaic_0001>
module attributes {stable_mosaic.version = 11 : i64} {
  func.func @_det_head_kernel(%arg0: i32, %arg1: memref<16x3072xbf16, #tpu.memory_space<vmem>>, %arg2: memref<3072x128xbf16, #tpu.memory_space<vmem>>, %arg3: memref<1x128xf32, #tpu.memory_space<vmem>>, %arg4: memref<128x128xbf16, #tpu.memory_space<vmem>>, %arg5: memref<1x128xf32, #tpu.memory_space<vmem>>, %arg6: memref<16x128xbf16, #tpu.memory_space<vmem>>) attributes {dimension_semantics = [#tpu.dimension_semantics<parallel>], iteration_bounds = array<i64: 2>, scalar_prefetch = 0 : i64, scratch_operands = 0 : i64, tpu.core_type = #tpu.core_type<tc>, window_params = [{transform_indices = @transform_0, window_bounds = array<i64: 16, 3072>}, {pipeline_mode = #tpu.pipeline_mode<synchronous>, transform_indices = @transform_1, window_bounds = array<i64: 3072, 128>}, {pipeline_mode = #tpu.pipeline_mode<synchronous>, transform_indices = @transform_2, window_bounds = array<i64: 1, 128>}, {pipeline_mode = #tpu.pipeline_mode<synchronous>, transform_indices = @transform_3, window_bounds = array<i64: 128, 128>}, {pipeline_mode = #tpu.pipeline_mode<synchronous>, transform_indices = @transform_4, window_bounds = array<i64: 1, 128>}, {transform_indices = @transform_5, window_bounds = array<i64: 16, 128>}]} {
    %c0 = arith.constant 0 : index
    %c0_0 = arith.constant 0 : index
    %0 = vector.load %arg1[%c0, %c0_0] : memref<16x3072xbf16, #tpu.memory_space<vmem>>, vector<16x3072xbf16>
    %c0_1 = arith.constant 0 : index
    %c0_2 = arith.constant 0 : index
    %1 = vector.load %arg2[%c0_1, %c0_2] : memref<3072x128xbf16, #tpu.memory_space<vmem>>, vector<3072x128xbf16>
    %cst = arith.constant dense<0.000000e+00> : vector<16x128xf32>
    %2 = tpu.matmul %0, %1, %cst {dimension_numbers = #tpu.dot_dimension_numbers<[1], [0], [0], [1], [0, 0, 1, 1], [], []>} : vector<16x3072xbf16>, vector<3072x128xbf16>, vector<16x128xf32> -> vector<16x128xf32>
    %c0_3 = arith.constant 0 : index
    %c0_4 = arith.constant 0 : index
    %3 = vector.load %arg3[%c0_3, %c0_4] : memref<1x128xf32, #tpu.memory_space<vmem>>, vector<1x128xf32>
    %4 = vector.broadcast %3 : vector<1x128xf32> to vector<16x128xf32>
    %5 = arith.addf %2, %4 : vector<16x128xf32>
    %6 = arith.negf %5 : vector<16x128xf32>
    %7 = math.exp %6 : vector<16x128xf32>
    %cst_5 = arith.constant 1.000000e+00 : f32
    %8 = vector.broadcast %cst_5 : f32 to vector<16x128xf32>
    %9 = arith.addf %8, %7 : vector<16x128xf32>
    %10 = arith.divf %8, %9 : vector<16x128xf32>
    %11 = arith.mulf %5, %10 : vector<16x128xf32>
    %12 = arith.truncf %11 : vector<16x128xf32> to vector<16x128xbf16>
    %c0_6 = arith.constant 0 : index
    %c0_7 = arith.constant 0 : index
    %13 = vector.load %arg4[%c0_6, %c0_7] : memref<128x128xbf16, #tpu.memory_space<vmem>>, vector<128x128xbf16>
    %cst_8 = arith.constant dense<0.000000e+00> : vector<16x128xf32>
    %14 = tpu.matmul %12, %13, %cst_8 {dimension_numbers = #tpu.dot_dimension_numbers<[1], [0], [0], [1], [0, 0, 1, 1], [], []>} : vector<16x128xbf16>, vector<128x128xbf16>, vector<16x128xf32> -> vector<16x128xf32>
    %c0_9 = arith.constant 0 : index
    %c0_10 = arith.constant 0 : index
    %15 = vector.load %arg5[%c0_9, %c0_10] : memref<1x128xf32, #tpu.memory_space<vmem>>, vector<1x128xf32>
    %16 = vector.broadcast %15 : vector<1x128xf32> to vector<16x128xf32>
    %17 = arith.addf %14, %16 : vector<16x128xf32>
    %18 = arith.negf %17 : vector<16x128xf32>
    %19 = math.exp %18 : vector<16x128xf32>
    %cst_11 = arith.constant 1.000000e+00 : f32
    %20 = vector.broadcast %cst_11 : f32 to vector<16x128xf32>
    %21 = arith.addf %20, %19 : vector<16x128xf32>
    %22 = arith.divf %20, %21 : vector<16x128xf32>
    %23 = arith.truncf %22 : vector<16x128xf32> to vector<16x128xbf16>
    %c0_12 = arith.constant 0 : index
    %c0_13 = arith.constant 0 : index
    %24 = vector.load %arg6[%c0_12, %c0_13] : memref<16x128xbf16, #tpu.memory_space<vmem>>, vector<16x128xbf16>
    tpu.vector_store %arg6[%c0_12, %c0_13], %23 {strides = array<i32>} : memref<16x128xbf16, #tpu.memory_space<vmem>>, vector<16x128xbf16>,
    return
  }
  func.func @transform_0(%arg0: i32) -> (i32, i32) {
    %c0_i32 = arith.constant 0 : i32
    %c0_i32_0 = arith.constant 0 : i32
    return %arg0, %c0_i32 : i32, i32
  }
  func.func @transform_1(%arg0: i32) -> (i32, i32) {
    %c0_i32 = arith.constant 0 : i32
    %c0_i32_0 = arith.constant 0 : i32
    %c0_i32_1 = arith.constant 0 : i32
    return %c0_i32, %c0_i32_0 : i32, i32
  }
  func.func @transform_2(%arg0: i32) -> (i32, i32) {
    %c0_i32 = arith.constant 0 : i32
    %c0_i32_0 = arith.constant 0 : i32
    %c0_i32_1 = arith.constant 0 : i32
    return %c0_i32, %c0_i32_0 : i32, i32
  }
  func.func @transform_3(%arg0: i32) -> (i32, i32) {
    %c0_i32 = arith.constant 0 : i32
    %c0_i32_0 = arith.constant 0 : i32
    %c0_i32_1 = arith.constant 0 : i32
    return %c0_i32, %c0_i32_0 : i32, i32
  }
  func.func @transform_4(%arg0: i32) -> (i32, i32) {
    %c0_i32 = arith.constant 0 : i32
    %c0_i32_0 = arith.constant 0 : i32
    %c0_i32_1 = arith.constant 0 : i32
    return %c0_i32, %c0_i32_0 : i32, i32
  }
  func.func @transform_5(%arg0: i32) -> (i32, i32) {
    %c0_i32 = arith.constant 0 : i32
    %c0_i32_0 = arith.constant 0 : i32
    return %arg0, %c0_i32 : i32, i32
  }
}

</mosaic_0001>

<llo_original>
// kernel: _forward_impl.1
$region0: #{_forward_impl.1}
  #allocation0 [shape = 'u32[]', space=smem, size = 0x4, offset = 0x4, fixed_abs, tag = 'smem constant byte address 0x4 - core index']
  #allocation1 [shape = 'u32[144,128]{1,0:T(1,128)}', space=vmem, size = 0x12000, scoped, tag = 'internal scratch']
  %s0 = inlined_call_operand.vmem [shape: bf16[32,3072], index: 0, kind: input, shape index: {}]
  %s1 = inlined_call_operand.vmem [shape: bf16[3072,128], index: 1, kind: input, shape index: {}]
  %s2 = inlined_call_operand.vmem [shape: f32[1,128], index: 2, kind: input, shape index: {}]
  %s3 = inlined_call_operand.vmem [shape: bf16[128,128], index: 3, kind: input, shape index: {}]
  %s4 = inlined_call_operand.vmem [shape: f32[1,128], index: 4, kind: input, shape index: {}]
  %s5 = inlined_call_operand.vmem [shape: bf16[32,128], index: 5, kind: output, shape index: {}]
  %s6 = sld [smem:[#allocation0]]
  $region53: #{_forward_impl.1} parent=0
    _
  %s8 = ssub.s32 1, %s6
  %s9 = scalar_select 0, %s8, %s6
  loop: start=0, step=1, limit=4
  $region2: #{_forward_impl.1} parent=0 // loop_pre_header
    _
  $region3: #{_forward_impl.1} parent=0 // loop_header
    %s11 = sphi 0, %s15
    %p12 = scmp.ge.s32.totalorder %s11, 4
    %s21 = sphi 0, %s23
    %s24 = sphi 0, %s21
    %s25 = sphi 0, %s24
    %s41 = sphi 0, %s25
    %s45 = sphi 0, %s45
    %s47 = sphi 0, %s45
    %s48 = sphi 0, %s47
    %s62 = sphi 0, %s48
    %s66 = sphi 0, %s66
    %s68 = sphi 0, %s66
    %s69 = sphi 0, %s68
    %s83 = sphi 0, %s69
    %s87 = sphi 0, %s87
    %s89 = sphi 0, %s87
    %s90 = sphi 0, %s89
    %s104 = sphi 0, %s90
    %s108 = sphi 0, %s108
    %s110 = sphi 0, %s108
    %s111 = sphi 0, %s110
    %s125 = sphi 0, %s111
    %s131 = sphi 0, %s133
    %s134 = sphi 0, %s131
    %s135 = sphi 0, %s134
    %s151 = sphi 0, %s135
  $region4: #{_forward_impl.1} parent=0 // loop_header_branch
    %14 = sbr.rel (%p12) target = $region8
  $region5: #{_forward_impl.1} parent=0 // loop_body
    %s16 = ssub.s32 %s11, 1
    %s17 = ssub.s32 %s11, 2
    %s18 = sadd.s32 %s11, 1
    %s19 = ssub.s32 %s11, %s18
    %p20 = scmp.eq.s32.totalorder %s19, 0
    %s22 = sadd.s32 %s21, 1
    %s23 = scalar_select %p20, %s21, %s22
    %p26 = pneg %p20
    %p27 = scmp.eq.s32.totalorder %s11, 1
    %p28 = por %p26, %p27
    %p29 = scmp.ne.s32.totalorder %s21, %s24
    %p30 = scmp.eq.s32.totalorder %s11, 0
    %p31 = por %p29, %p30
    %p32 = scmp.ne.s32.totalorder %s21, %s24
    %p33 = scmp.eq.s32.totalorder %s16, 1
    %p34 = por %p32, %p33
    %p35 = scmp.ne.s32.totalorder %s24, %s25
    %p36 = scmp.eq.s32.totalorder %s16, 0
    %p37 = por %p35, %p36
    %p38 = scmp.ne.s32.totalorder %s24, %s25
    %p39 = scmp.eq.s32.totalorder %s17, 1
    %p40 = por %p38, %p39
    %p42 = scmp.ne.s32.totalorder %s25, %s41
    %p43 = scmp.eq.s32.totalorder %s17, 0
    %p44 = por %p42, %p43
    %s46 = sadd.s32 %s45, 1
    %p49 = scmp.eq.s32.totalorder %s11, 1
    %p50 = scmp.ne.s32.totalorder %s45, %s47
    %p51 = scmp.eq.s32.totalorder %s11, 0
    %p52 = por %p50, %p51
    %p53 = scmp.ne.s32.totalorder %s45, %s47
    %p54 = scmp.eq.s32.totalorder %s16, 1
    %p55 = por %p53, %p54
    %p56 = scmp.ne.s32.totalorder %s47, %s48
    %p57 = scmp.eq.s32.totalorder %s16, 0
    %p58 = por %p56, %p57
    %p59 = scmp.ne.s32.totalorder %s47, %s48
    %p60 = scmp.eq.s32.totalorder %s17, 1
    %p61 = por %p59, %p60
    %p63 = scmp.ne.s32.totalorder %s48, %s62
    %p64 = scmp.eq.s32.totalorder %s17, 0
    %p65 = por %p63, %p64
    %s67 = sadd.s32 %s66, 1
    %p70 = scmp.eq.s32.totalorder %s11, 1
    %p71 = scmp.ne.s32.totalorder %s66, %s68
    %p72 = scmp.eq.s32.totalorder %s11, 0
    %p73 = por %p71, %p72
    %p74 = scmp.ne.s32.totalorder %s66, %s68
    %p75 = scmp.eq.s32.totalorder %s16, 1
    %p76 = por %p74, %p75
    %p77 = scmp.ne.s32.totalorder %s68, %s69
    %p78 = scmp.eq.s32.totalorder %s16, 0
    %p79 = por %p77, %p78
    %p80 = scmp.ne.s32.totalorder %s68, %s69
    %p81 = scmp.eq.s32.totalorder %s17, 1
    %p82 = por %p80, %p81
    %p84 = scmp.ne.s32.totalorder %s69, %s83
    %p85 = scmp.eq.s32.totalorder %s17, 0
    %p86 = por %p84, %p85
    %s88 = sadd.s32 %s87, 1
    %p91 = scmp.eq.s32.totalorder %s11, 1
    %p92 = scmp.ne.s32.totalorder %s87, %s89
    %p93 = scmp.eq.s32.totalorder %s11, 0
    %p94 = por %p92, %p93
    %p95 = scmp.ne.s32.totalorder %s87, %s89
    %p96 = scmp.eq.s32.totalorder %s16, 1
    %p97 = por %p95, %p96
    %p98 = scmp.ne.s32.totalorder %s89, %s90
    %p99 = scmp.eq.s32.totalorder %s16, 0
    %p100 = por %p98, %p99
    %p101 = scmp.ne.s32.totalorder %s89, %s90
    %p102 = scmp.eq.s32.totalorder %s17, 1
    %p103 = por %p101, %p102
    %p105 = scmp.ne.s32.totalorder %s90, %s104
    %p106 = scmp.eq.s32.totalorder %s17, 0
    %p107 = por %p105, %p106
    %s109 = sadd.s32 %s108, 1
    %p112 = scmp.eq.s32.totalorder %s11, 1
    %p113 = scmp.ne.s32.totalorder %s108, %s110
    %p114 = scmp.eq.s32.totalorder %s11, 0
    %p115 = por %p113, %p114
    %p116 = scmp.ne.s32.totalorder %s108, %s110
    %p117 = scmp.eq.s32.totalorder %s16, 1
    %p118 = por %p116, %p117
    %p119 = scmp.ne.s32.totalorder %s110, %s111
    %p120 = scmp.eq.s32.totalorder %s16, 0
    %p121 = por %p119, %p120
    %p122 = scmp.ne.s32.totalorder %s110, %s111
    %p123 = scmp.eq.s32.totalorder %s17, 1
    %p124 = por %p122, %p123
    %p126 = scmp.ne.s32.totalorder %s111, %s125
    %p127 = scmp.eq.s32.totalorder %s17, 0
    %p128 = por %p126, %p127
    %s129 = ssub.s32 %s11, %s18
    %p130 = scmp.eq.s32.totalorder %s129, 0
    %s132 = sadd.s32 %s131, 1
    %s133 = scalar_select %p130, %s131, %s132
    %p136 = pneg %p130
    %p137 = scmp.eq.s32.totalorder %s11, 1
    %p138 = por %p136, %p137
    %p139 = scmp.ne.s32.totalorder %s131, %s134
    %p140 = scmp.eq.s32.totalorder %s11, 0
    %p141 = por %p139, %p140
    %p142 = scmp.ne.s32.totalorder %s131, %s134
    %p143 = scmp.eq.s32.totalorder %s16, 1
    %p144 = por %p142, %p143
    %p145 = scmp.ne.s32.totalorder %s134, %s135
    %p146 = scmp.eq.s32.totalorder %s16, 0
    %p147 = por %p145, %p146
    %p148 = scmp.ne.s32.totalorder %s134, %s135
    %p149 = scmp.eq.s32.totalorder %s17, 1
    %p150 = por %p148, %p149
    %p152 = scmp.ne.s32.totalorder %s135, %s151
    %p153 = scmp.eq.s32.totalorder %s17, 0
    %p154 = por %p152, %p153
    %p155 = scmp.le.s32.totalorder 1, %s11
    %p156 = scmp.lt.s32.totalorder %s11, 3
    %p157 = pnand %p155, %p156
    %p158 = pneg %p157
    // Predicated region
    $region9: #{_forward_impl.1} parent=5 // pred_check
      _
    $region10: #{_forward_impl.1} parent=5 // pred_check_branch
      %160 = sbr.rel (%p157) target = $region12
    $region11: #{_forward_impl.1} parent=5 // pred_region
      %s161 = ssub.s32 %s11, 1
      // Predicated region
      $region13: #{_forward_impl.1} parent=11 // pred_check
        %p162 = pneg %p58
      $region14: #{_forward_impl.1} parent=11 // pred_check_branch
        %164 = sbr.rel (%p162) target = $region16
      $region15: #{_forward_impl.1} parent=11 // pred_region
        _
      $region16: #{_forward_impl.1} parent=11 // pred_fallthru
        _
      // Predicated region
      $region17: #{_forward_impl.1} parent=11 // pred_check
        %p165 = pneg %p79
      $region18: #{_forward_impl.1} parent=11 // pred_check_branch
        %167 = sbr.rel (%p165) target = $region20
      $region19: #{_forward_impl.1} parent=11 // pred_region
        _
      $region20: #{_forward_impl.1} parent=11 // pred_fallthru
        _
      // Predicated region
      $region21: #{_forward_impl.1} parent=11 // pred_check
        %p168 = pneg %p100
      $region22: #{_forward_impl.1} parent=11 // pred_check_branch
        %170 = sbr.rel (%p168) target = $region24
      $region23: #{_forward_impl.1} parent=11 // pred_region
        _
      $region24: #{_forward_impl.1} parent=11 // pred_fallthru
        _
      // Predicated region
      $region25: #{_forward_impl.1} parent=11 // pred_check
        %p171 = pneg %p121
      $region26: #{_forward_impl.1} parent=11 // pred_check_branch
        %173 = sbr.rel (%p171) target = $region28
      $region27: #{_forward_impl.1} parent=11 // pred_region
        _
      $region28: #{_forward_impl.1} parent=11 // pred_fallthru
        _
    $region12: #{_forward_impl.1} parent=5 // pred_fallthru
      _
    %p174 = scmp.lt.s32.totalorder %s11, 2
    // Predicated region
    $region29: #{_forward_impl.1} parent=5 // pred_check
      %p175 = pneg %p174
    $region30: #{_forward_impl.1} parent=5 // pred_check_branch
      %177 = sbr.rel (%p175) target = $region32
    $region31: #{_forward_impl.1} parent=5 // pred_region
      // Predicated region
      $region33: #{_forward_impl.1} parent=31 // pred_check
        %p178 = pneg %p31
      $region34: #{_forward_impl.1} parent=31 // pred_check_branch
        %180 = sbr.rel (%p178) target = $region36
      $region35: #{_forward_impl.1} parent=31 // pred_region
        %s181 = smul.u32 2, %s11
        %p182 = scmp.lt.s32.totalorder %s181, 3
        %s183 = scalar_select %p182, %s181, 3
        %s184 = smul.addr %s183, 24
        %s185 = smul.addr %s184, 4
        %s186 = scalar_lea.vmem %s0, %s185
        %s187 = smul.u32 2, %s11
      $region36: #{_forward_impl.1} parent=31 // pred_fallthru
        _
    $region32: #{_forward_impl.1} parent=5 // pred_fallthru
      _
    %p188 = scmp.le.s32.totalorder 1, %s11
    %p189 = scmp.lt.s32.totalorder %s11, 3
    %p190 = pnand %p188, %p189
    %p191 = pneg %p190
    // Predicated region
    $region37: #{_forward_impl.1} parent=5 // pred_check
      _
    $region38: #{_forward_impl.1} parent=5 // pred_check_branch
      %193 = sbr.rel (%p190) target = $region40
    $region39: #{_forward_impl.1} parent=5 // pred_region
      %s194 = ssub.s32 %s11, 1
      %s195 = smul.u32 2, %s16
      %p196 = scmp.lt.s32.totalorder %s195, 3
      %s197 = scalar_select %p196, %s195, 3
      %s198 = smul.addr %s197, 24
      %s199 = smul.addr %s198, 4
      %s200 = scalar_lea.vmem %s0, %s199
      %p201 = pneg %p37
      %p202 = pneg %p34
      %p203 = pneg %p58
      %p204 = pneg %p55
      %p205 = pneg %p79
      %p206 = pneg %p76
      %p207 = pneg %p100
      %p208 = pneg %p97
      %p209 = pneg %p121
      %p210 = pneg %p118
      %p211 = pneg %p147
      %p212 = pneg %p144
      %s213 = smul.u32 2, %s16
      %p214 = scmp.lt.s32.totalorder %s213, 3
      %s215 = scalar_select %p214, %s213, 3
      %s216 = smul.addr %s215, 4
      %s217 = scalar_lea.vmem %s5, %s216
      %s218 = smul.u32 2, %s16
      %p219 = scmp.lt.s32.totalorder %s218, 3
      %s220 = scalar_select %p219, %s218, 3
      %s221 = smul.addr %s220, 24
      %s222 = smul.addr %s221, 4
      %s223 = scalar_lea.vmem %s0, %s222
      %s224 = smul.u32 2, %s16
      %s225 = smul.u32 2, %s16
      %p226 = scmp.lt.s32.totalorder %s225, 3
      %s227 = scalar_select %p226, %s225, 3
      %s228 = smul.addr %s227, 4
      %s229 = scalar_lea.vmem %s5, %s228
      %s230 = smul.u32 2, %s16
      %v232 = vld [vmem:[%s223] sm:$0xff]
      %v233 = vld [vmem:[%s223 + $0x8] sm:$0xff]
      %v234 = vld [vmem:[%s223 + $0x10] sm:$0xff]
      %v235 = vld [vmem:[%s223 + $0x18] sm:$0xff]
      %v236 = vld [vmem:[%s223 + $0x20] sm:$0xff]
      %v237 = vld [vmem:[%s223 + $0x28] sm:$0xff]
      %v238 = vld [vmem:[%s223 + $0x30] sm:$0xff]
      %v239 = vld [vmem:[%s223 + $0x38] sm:$0xff]
      %v240 = vld [vmem:[%s223 + $0x40] sm:$0xff]
      %v241 = vld [vmem:[%s223 + $0x48] sm:$0xff]
      %v242 = vld [vmem:[%s223 + $0x50] sm:$0xff]
      %v243 = vld [vmem:[%s223 + $0x58] sm:$0xff]
      %v244 = vld [vmem:[%s223 + $0x60] sm:$0xff]
      %v245 = vld [vmem:[%s223 + $0x68] sm:$0xff]
      %v246 = vld [vmem:[%s223 + $0x70] sm:$0xff]
      %v247 = vld [vmem:[%s223 + $0x78] sm:$0xff]
      %v248 = vld [vmem:[%s223 + $0x80] sm:$0xff]
      %v249 = vld [vmem:[%s223 + $0x88] sm:$0xff]
      %v250 = vld [vmem:[%s223 + $0x90] sm:$0xff]
      %v251 = vld [vmem:[%s223 + $0x98] sm:$0xff]
      %v252 = vld [vmem:[%s223 + $0xa0] sm:$0xff]
      %v253 = vld [vmem:[%s223 + $0xa8] sm:$0xff]
      %v254 = vld [vmem:[%s223 + $0xb0] sm:$0xff]
      %v255 = vld [vmem:[%s223 + $0xb8] sm:$0xff]
      %v256 = vld [vmem:[%s1] sm:$0xf]
      %v257 = vld [vmem:[%s1 + $0x4] sm:$0xf]
      %v258 = vld [vmem:[%s1 + $0x8] sm:$0xf]
      %v259 = vld [vmem:[%s1 + $0xc] sm:$0xf]
      %v260 = vld [vmem:[%s1 + $0x10] sm:$0xf]
      %v261 = vld [vmem:[%s1 + $0x14] sm:$0xf]
      %v262 = vld [vmem:[%s1 + $0x18] sm:$0xf]
      %v263 = vld [vmem:[%s1 + $0x1c] sm:$0xf]
      %v264 = vld [vmem:[%s1 + $0x20] sm:$0xf]
      %v265 = vld [vmem:[%s1 + $0x24] sm:$0xf]
      %v266 = vld [vmem:[%s1 + $0x28] sm:$0xf]
      %v267 = vld [vmem:[%s1 + $0x2c] sm:$0xf]
      %v268 = vld [vmem:[%s1 + $0x30] sm:$0xf]
      %v269 = vld [vmem:[%s1 + $0x34] sm:$0xf]
      %v270 = vld [vmem:[%s1 + $0x38] sm:$0xf]
      %v271 = vld [vmem:[%s1 + $0x3c] sm:$0xf]
      %v272 = vld [vmem:[%s1 + $0x40] sm:$0xf]
      %v273 = vld [vmem:[%s1 + $0x44] sm:$0xf]
      %v274 = vld [vmem:[%s1 + $0x48] sm:$0xf]
      %v275 = vld [vmem:[%s1 + $0x4c] sm:$0xf]
      %v276 = vld [vmem:[%s1 + $0x50] sm:$0xf]
      %v277 = vld [vmem:[%s1 + $0x54] sm:$0xf]
      %v278 = vld [vmem:[%s1 + $0x58] sm:$0xf]
      %v279 = vld [vmem:[%s1 + $0x5c] sm:$0xf]
      %v280 = vld [vmem:[%s1 + $0x60] sm:$0xf]
      %v281 = vld [vmem:[%s1 + $0x64] sm:$0xf]
      %v282 = vld [vmem:[%s1 + $0x68] sm:$0xf]
      %v283 = vld [vmem:[%s1 + $0x6c] sm:$0xf]
      %v284 = vld [vmem:[%s1 + $0x70] sm:$0xf]
      %v285 = vld [vmem:[%s1 + $0x74] sm:$0xf]
      %v286 = vld [vmem:[%s1 + $0x78] sm:$0xf]
      %v287 = vld [vmem:[%s1 + $0x7c] sm:$0xf]
      %v288 = vld [vmem:[%s1 + $0x80] sm:$0xf]
      %v289 = vld [vmem:[%s1 + $0x84] sm:$0xf]
      %v290 = vld [vmem:[%s1 + $0x88] sm:$0xf]
      %v291 = vld [vmem:[%s1 + $0x8c] sm:$0xf]
      %v292 = vld [vmem:[%s1 + $0x90] sm:$0xf]
      %v293 = vld [vmem:[%s1 + $0x94] sm:$0xf]
      %v294 = vld [vmem:[%s1 + $0x98] sm:$0xf]
      %v295 = vld [vmem:[%s1 + $0x9c] sm:$0xf]
      %v296 = vld [vmem:[%s1 + $0xa0] sm:$0xf]
      %v297 = vld [vmem:[%s1 + $0xa4] sm:$0xf]
      %v298 = vld [vmem:[%s1 + $0xa8] sm:$0xf]
      %v299 = vld [vmem:[%s1 + $0xac] sm:$0xf]
      %v300 = vld [vmem:[%s1 + $0xb0] sm:$0xf]
      %v301 = vld [vmem:[%s1 + $0xb4] sm:$0xf]
      %v302 = vld [vmem:[%s1 + $0xb8] sm:$0xf]
      %v303 = vld [vmem:[%s1 + $0xbc] sm:$0xf]
      %v304 = vld [vmem:[%s1 + $0xc0] sm:$0xf]
      %v305 = vld [vmem:[%s1 + $0xc4] sm:$0xf]
      %v306 = vld [vmem:[%s1 + $0xc8] sm:$0xf]
      %v307 = vld [vmem:[%s1 + $0xcc] sm:$0xf]
      %v308 = vld [vmem:[%s1 + $0xd0] sm:$0xf]
      %v309 = vld [vmem:[%s1 + $0xd4] sm:$0xf]
      %v310 = vld [vmem:[%s1 + $0xd8] sm:$0xf]
      %v311 = vld [vmem:[%s1 + $0xdc] sm:$0xf]
      %v312 = vld [vmem:[%s1 + $0xe0] sm:$0xf]
      %v313 = vld [vmem:[%s1 + $0xe4] sm:$0xf]
      %v314 = vld [vmem:[%s1 + $0xe8] sm:$0xf]
      %v315 = vld [vmem:[%s1 + $0xec] sm:$0xf]
      %v316 = vld [vmem:[%s1 + $0xf0] sm:$0xf]
      %v317 = vld [vmem:[%s1 + $0xf4] sm:$0xf]
      %v318 = vld [vmem:[%s1 + $0xf8] sm:$0xf]
      %v319 = vld [vmem:[%s1 + $0xfc] sm:$0xf]
      %v320 = vld [vmem:[%s1 + $0x100] sm:$0xf]
      %v321 = vld [vmem:[%s1 + $0x104] sm:$0xf]
      %v322 = vld [vmem:[%s1 + $0x108] sm:$0xf]
      %v323 = vld [vmem:[%s1 + $0x10c] sm:$0xf]
      %v324 = vld [vmem:[%s1 + $0x110] sm:$0xf]
      %v325 = vld [vmem:[%s1 + $0x114] sm:$0xf]
      %v326 = vld [vmem:[%s1 + $0x118] sm:$0xf]
      %v327 = vld [vmem:[%s1 + $0x11c] sm:$0xf]
      %v328 = vld [vmem:[%s1 + $0x120] sm:$0xf]
      %v329 = vld [vmem:[%s1 + $0x124] sm:$0xf]
      %v330 = vld [vmem:[%s1 + $0x128] sm:$0xf]
      %v331 = vld [vmem:[%s1 + $0x12c] sm:$0xf]
      %v332 = vld [vmem:[%s1 + $0x130] sm:$0xf]
      %v333 = vld [vmem:[%s1 + $0x134] sm:$0xf]
      %v334 = vld [vmem:[%s1 + $0x138] sm:$0xf]
      %v335 = vld [vmem:[%s1 + $0x13c] sm:$0xf]
      %v336 = vld [vmem:[%s1 + $0x140] sm:$0xf]
      %v337 = vld [vmem:[%s1 + $0x144] sm:$0xf]
      %v338 = vld [vmem:[%s1 + $0x148] sm:$0xf]
      %v339 = vld [vmem:[%s1 + $0x14c] sm:$0xf]
      %v340 = vld [vmem:[%s1 + $0x150] sm:$0xf]
      %v341 = vld [vmem:[%s1 + $0x154] sm:$0xf]
      %v342 = vld [vmem:[%s1 + $0x158] sm:$0xf]
      %v343 = vld [vmem:[%s1 + $0x15c] sm:$0xf]
      %v344 = vld [vmem:[%s1 + $0x160] sm:$0xf]
      %v345 = vld [vmem:[%s1 + $0x164] sm:$0xf]
      %v346 = vld [vmem:[%s1 + $0x168] sm:$0xf]
      %v347 = vld [vmem:[%s1 + $0x16c] sm:$0xf]
      %v348 = vld [vmem:[%s1 + $0x170] sm:$0xf]
      %v349 = vld [vmem:[%s1 + $0x174] sm:$0xf]
      %v350 = vld [vmem:[%s1 + $0x178] sm:$0xf]
      %v351 = vld [vmem:[%s1 + $0x17c] sm:$0xf]
      %v352 = vld [vmem:[%s1 + $0x180] sm:$0xf]
      %v353 = vld [vmem:[%s1 + $0x184] sm:$0xf]
      %v354 = vld [vmem:[%s1 + $0x188] sm:$0xf]
      %v355 = vld [vmem:[%s1 + $0x18c] sm:$0xf]
      %v356 = vld [vmem:[%s1 + $0x190] sm:$0xf]
      %v357 = vld [vmem:[%s1 + $0x194] sm:$0xf]
      %v358 = vld [vmem:[%s1 + $0x198] sm:$0xf]
      %v359 = vld [vmem:[%s1 + $0x19c] sm:$0xf]
      %v360 = vld [vmem:[%s1 + $0x1a0] sm:$0xf]
      %v361 = vld [vmem:[%s1 + $0x1a4] sm:$0xf]
      %v362 = vld [vmem:[%s1 + $0x1a8] sm:$0xf]
      %v363 = vld [vmem:[%s1 + $0x1ac] sm:$0xf]
      %v364 = vld [vmem:[%s1 + $0x1b0] sm:$0xf]
      %v365 = vld [vmem:[%s1 + $0x1b4] sm:$0xf]
      %v366 = vld [vmem:[%s1 + $0x1b8] sm:$0xf]
      %v367 = vld [vmem:[%s1 + $0x1bc] sm:$0xf]
      %v368 = vld [vmem:[%s1 + $0x1c0] sm:$0xf]
      %v369 = vld [vmem:[%s1 + $0x1c4] sm:$0xf]
      %v370 = vld [vmem:[%s1 + $0x1c8] sm:$0xf]
      %v371 = vld [vmem:[%s1 + $0x1cc] sm:$0xf]
      %v372 = vld [vmem:[%s1 + $0x1d0] sm:$0xf]
      %v373 = vld [vmem:[%s1 + $0x1d4] sm:$0xf]
      %v374 = vld [vmem:[%s1 + $0x1d8] sm:$0xf]
      %v375 = vld [vmem:[%s1 + $0x1dc] sm:$0xf]
      %v376 = vld [vmem:[%s1 + $0x1e0] sm:$0xf]
      %v377 = vld [vmem:[%s1 + $0x1e4] sm:$0xf]
      %v378 = vld [vmem:[%s1 + $0x1e8] sm:$0xf]
      %v379 = vld [vmem:[%s1 + $0x1ec] sm:$0xf]
      %v380 = vld [vmem:[%s1 + $0x1f0] sm:$0xf]
      %v381 = vld [vmem:[%s1 + $0x1f4] sm:$0xf]
      %v382 = vld [vmem:[%s1 + $0x1f8] sm:$0xf]
      %v383 = vld [vmem:[%s1 + $0x1fc] sm:$0xf]
      %v384 = vld [vmem:[%s1 + $0x200] sm:$0xf]
      %v385 = vld [vmem:[%s1 + $0x204] sm:$0xf]
      %v386 = vld [vmem:[%s1 + $0x208] sm:$0xf]
      %v387 = vld [vmem:[%s1 + $0x20c] sm:$0xf]
      %v388 = vld [vmem:[%s1 + $0x210] sm:$0xf]
      %v389 = vld [vmem:[%s1 + $0x214] sm:$0xf]
      %v390 = vld [vmem:[%s1 + $0x218] sm:$0xf]
      %v391 = vld [vmem:[%s1 + $0x21c] sm:$0xf]
      %v392 = vld [vmem:[%s1 + $0x220] sm:$0xf]
      %v393 = vld [vmem:[%s1 + $0x224] sm:$0xf]
      %v394 = vld [vmem:[%s1 + $0x228] sm:$0xf]
      %v395 = vld [vmem:[%s1 + $0x22c] sm:$0xf]
      %v396 = vld [vmem:[%s1 + $0x230] sm:$0xf]
      %v397 = vld [vmem:[%s1 + $0x234] sm:$0xf]
      %v398 = vld [vmem:[%s1 + $0x238] sm:$0xf]
      %v399 = vld [vmem:[%s1 + $0x23c] sm:$0xf]
      %v400 = vld [vmem:[%s1 + $0x240] sm:$0xf]
      %v401 = vld [vmem:[%s1 + $0x244] sm:$0xf]
      %v402 = vld [vmem:[%s1 + $0x248] sm:$0xf]
      %v403 = vld [vmem:[%s1 + $0x24c] sm:$0xf]
      %v404 = vld [vmem:[%s1 + $0x250] sm:$0xf]
      %v405 = vld [vmem:[%s1 + $0x254] sm:$0xf]
      %v406 = vld [vmem:[%s1 + $0x258] sm:$0xf]
      %v407 = vld [vmem:[%s1 + $0x25c] sm:$0xf]
      %v408 = vld [vmem:[%s1 + $0x260] sm:$0xf]
      %v409 = vld [vmem:[%s1 + $0x264] sm:$0xf]
      %v410 = vld [vmem:[%s1 + $0x268] sm:$0xf]
      %v411 = vld [vmem:[%s1 + $0x26c] sm:$0xf]
      %v412 = vld [vmem:[%s1 + $0x270] sm:$0xf]
      %v413 = vld [vmem:[%s1 + $0x274] sm:$0xf]
      %v414 = vld [vmem:[%s1 + $0x278] sm:$0xf]
      %v415 = vld [vmem:[%s1 + $0x27c] sm:$0xf]
      %v416 = vld [vmem:[%s1 + $0x280] sm:$0xf]
      %v417 = vld [vmem:[%s1 + $0x284] sm:$0xf]
      %v418 = vld [vmem:[%s1 + $0x288] sm:$0xf]
      %v419 = vld [vmem:[%s1 + $0x28c] sm:$0xf]
      %v420 = vld [vmem:[%s1 + $0x290] sm:$0xf]
      %v421 = vld [vmem:[%s1 + $0x294] sm:$0xf]
      %v422 = vld [vmem:[%s1 + $0x298] sm:$0xf]
      %v423 = vld [vmem:[%s1 + $0x29c] sm:$0xf]
      %v424 = vld [vmem:[%s1 + $0x2a0] sm:$0xf]
      %v425 = vld [vmem:[%s1 + $0x2a4] sm:$0xf]
      %v426 = vld [vmem:[%s1 + $0x2a8] sm:$0xf]
      %v427 = vld [vmem:[%s1 + $0x2ac] sm:$0xf]
      %v428 = vld [vmem:[%s1 + $0x2b0] sm:$0xf]
      %v429 = vld [vmem:[%s1 + $0x2b4] sm:$0xf]
      %v430 = vld [vmem:[%s1 + $0x2b8] sm:$0xf]
      %v431 = vld [vmem:[%s1 + $0x2bc] sm:$0xf]
      %v432 = vld [vmem:[%s1 + $0x2c0] sm:$0xf]
      %v433 = vld [vmem:[%s1 + $0x2c4] sm:$0xf]
      %v434 = vld [vmem:[%s1 + $0x2c8] sm:$0xf]
      %v435 = vld [vmem:[%s1 + $0x2cc] sm:$0xf]
      %v436 = vld [vmem:[%s1 + $0x2d0] sm:$0xf]
      %v437 = vld [vmem:[%s1 + $0x2d4] sm:$0xf]
      %v438 = vld [vmem:[%s1 + $0x2d8] sm:$0xf]
      %v439 = vld [vmem:[%s1 + $0x2dc] sm:$0xf]
      %v440 = vld [vmem:[%s1 + $0x2e0] sm:$0xf]
      %v441 = vld [vmem:[%s1 + $0x2e4] sm:$0xf]
      %v442 = vld [vmem:[%s1 + $0x2e8] sm:$0xf]
      %v443 = vld [vmem:[%s1 + $0x2ec] sm:$0xf]
      %v444 = vld [vmem:[%s1 + $0x2f0] sm:$0xf]
      %v445 = vld [vmem:[%s1 + $0x2f4] sm:$0xf]
      %v446 = vld [vmem:[%s1 + $0x2f8] sm:$0xf]
      %v447 = vld [vmem:[%s1 + $0x2fc] sm:$0xf]
      %v448 = vld [vmem:[%s1 + $0x300] sm:$0xf]
      %v449 = vld [vmem:[%s1 + $0x304] sm:$0xf]
      %v450 = vld [vmem:[%s1 + $0x308] sm:$0xf]
      %v451 = vld [vmem:[%s1 + $0x30c] sm:$0xf]
      %v452 = vld [vmem:[%s1 + $0x310] sm:$0xf]
      %v453 = vld [vmem:[%s1 + $0x314] sm:$0xf]
      %v454 = vld [vmem:[%s1 + $0x318] sm:$0xf]
      %v455 = vld [vmem:[%s1 + $0x31c] sm:$0xf]
      %v456 = vld [vmem:[%s1 + $0x320] sm:$0xf]
      %v457 = vld [vmem:[%s1 + $0x324] sm:$0xf]
      %v458 = vld [vmem:[%s1 + $0x328] sm:$0xf]
      %v459 = vld [vmem:[%s1 + $0x32c] sm:$0xf]
      %v460 = vld [vmem:[%s1 + $0x330] sm:$0xf]
      %v461 = vld [vmem:[%s1 + $0x334] sm:$0xf]
      %v462 = vld [vmem:[%s1 + $0x338] sm:$0xf]
      %v463 = vld [vmem:[%s1 + $0x33c] sm:$0xf]
      %v464 = vld [vmem:[%s1 + $0x340] sm:$0xf]
      %v465 = vld [vmem:[%s1 + $0x344] sm:$0xf]
      %v466 = vld [vmem:[%s1 + $0x348] sm:$0xf]
      %v467 = vld [vmem:[%s1 + $0x34c] sm:$0xf]
      %v468 = vld [vmem:[%s1 + $0x350] sm:$0xf]
      %v469 = vld [vmem:[%s1 + $0x354] sm:$0xf]
      %v470 = vld [vmem:[%s1 + $0x358] sm:$0xf]
      %v471 = vld [vmem:[%s1 + $0x35c] sm:$0xf]
      %v472 = vld [vmem:[%s1 + $0x360] sm:$0xf]
      %v473 = vld [vmem:[%s1 + $0x364] sm:$0xf]
      %v474 = vld [vmem:[%s1 + $0x368] sm:$0xf]
      %v475 = vld [vmem:[%s1 + $0x36c] sm:$0xf]
      %v476 = vld [vmem:[%s1 + $0x370] sm:$0xf]
      %v477 = vld [vmem:[%s1 + $0x374] sm:$0xf]
      %v478 = vld [vmem:[%s1 + $0x378] sm:$0xf]
      %v479 = vld [vmem:[%s1 + $0x37c] sm:$0xf]
      %v480 = vld [vmem:[%s1 + $0x380] sm:$0xf]
      %v481 = vld [vmem:[%s1 + $0x384] sm:$0xf]
      %v482 = vld [vmem:[%s1 + $0x388] sm:$0xf]
      %v483 = vld [vmem:[%s1 + $0x38c] sm:$0xf]
      %v484 = vld [vmem:[%s1 + $0x390] sm:$0xf]
      %v485 = vld [vmem:[%s1 + $0x394] sm:$0xf]
      %v486 = vld [vmem:[%s1 + $0x398] sm:$0xf]
      %v487 = vld [vmem:[%s1 + $0x39c] sm:$0xf]
      %v488 = vld [vmem:[%s1 + $0x3a0] sm:$0xf]
      %v489 = vld [vmem:[%s1 + $0x3a4] sm:$0xf]
      %v490 = vld [vmem:[%s1 + $0x3a8] sm:$0xf]
      %v491 = vld [vmem:[%s1 + $0x3ac] sm:$0xf]
      %v492 = vld [vmem:[%s1 + $0x3b0] sm:$0xf]
      %v493 = vld [vmem:[%s1 + $0x3b4] sm:$0xf]
      %v494 = vld [vmem:[%s1 + $0x3b8] sm:$0xf]
      %v495 = vld [vmem:[%s1 + $0x3bc] sm:$0xf]
      %v496 = vld [vmem:[%s1 + $0x3c0] sm:$0xf]
      %v497 = vld [vmem:[%s1 + $0x3c4] sm:$0xf]
      %v498 = vld [vmem:[%s1 + $0x3c8] sm:$0xf]
      %v499 = vld [vmem:[%s1 + $0x3cc] sm:$0xf]
      %v500 = vld [vmem:[%s1 + $0x3d0] sm:$0xf]
      %v501 = vld [vmem:[%s1 + $0x3d4] sm:$0xf]
      %v502 = vld [vmem:[%s1 + $0x3d8] sm:$0xf]
      %v503 = vld [vmem:[%s1 + $0x3dc] sm:$0xf]
      %v504 = vld [vmem:[%s1 + $0x3e0] sm:$0xf]
      %v505 = vld [vmem:[%s1 + $0x3e4] sm:$0xf]
      %v506 = vld [vmem:[%s1 + $0x3e8] sm:$0xf]
      %v507 = vld [vmem:[%s1 + $0x3ec] sm:$0xf]
      %v508 = vld [vmem:[%s1 + $0x3f0] sm:$0xf]
      %v509 = vld [vmem:[%s1 + $0x3f4] sm:$0xf]
      %v510 = vld [vmem:[%s1 + $0x3f8] sm:$0xf]
      %v511 = vld [vmem:[%s1 + $0x3fc] sm:$0xf]
      %v512 = vld [vmem:[%s1 + $0x400] sm:$0xf]
      %v513 = vld [vmem:[%s1 + $0x404] sm:$0xf]
      %v514 = vld [vmem:[%s1 + $0x408] sm:$0xf]
      %v515 = vld [vmem:[%s1 + $0x40c] sm:$0xf]
      %v516 = vld [vmem:[%s1 + $0x410] sm:$0xf]
      %v517 = vld [vmem:[%s1 + $0x414] sm:$0xf]
      %v518 = vld [vmem:[%s1 + $0x418] sm:$0xf]
      %v519 = vld [vmem:[%s1 + $0x41c] sm:$0xf]
      %v520 = vld [vmem:[%s1 + $0x420] sm:$0xf]
      %v521 = vld [vmem:[%s1 + $0x424] sm:$0xf]
      %v522 = vld [vmem:[%s1 + $0x428] sm:$0xf]
      %v523 = vld [vmem:[%s1 + $0x42c] sm:$0xf]
      %v524 = vld [vmem:[%s1 + $0x430] sm:$0xf]
      %v525 = vld [vmem:[%s1 + $0x434] sm:$0xf]
      %v526 = vld [vmem:[%s1 + $0x438] sm:$0xf]
      %v527 = vld [vmem:[%s1 + $0x43c] sm:$0xf]
      %v528 = vld [vmem:[%s1 + $0x440] sm:$0xf]
      %v529 = vld [vmem:[%s1 + $0x444] sm:$0xf]
      %v530 = vld [vmem:[%s1 + $0x448] sm:$0xf]
      %v531 = vld [vmem:[%s1 + $0x44c] sm:$0xf]
      %v532 = vld [vmem:[%s1 + $0x450] sm:$0xf]
      %v533 = vld [vmem:[%s1 + $0x454] sm:$0xf]
      %v534 = vld [vmem:[%s1 + $0x458] sm:$0xf]
      %v535 = vld [vmem:[%s1 + $0x45c] sm:$0xf]
      %v536 = vld [vmem:[%s1 + $0x460] sm:$0xf]
      %v537 = vld [vmem:[%s1 + $0x464] sm:$0xf]
      %v538 = vld [vmem:[%s1 + $0x468] sm:$0xf]
      %v539 = vld [vmem:[%s1 + $0x46c] sm:$0xf]
      %v540 = vld [vmem:[%s1 + $0x470] sm:$0xf]
      %v541 = vld [vmem:[%s1 + $0x474] sm:$0xf]
      %v542 = vld [vmem:[%s1 + $0x478] sm:$0xf]
      %v543 = vld [vmem:[%s1 + $0x47c] sm:$0xf]
      %v544 = vld [vmem:[%s1 + $0x480] sm:$0xf]
      %v545 = vld [vmem:[%s1 + $0x484] sm:$0xf]
      %v546 = vld [vmem:[%s1 + $0x488] sm:$0xf]
      %v547 = vld [vmem:[%s1 + $0x48c] sm:$0xf]
      %v548 = vld [vmem:[%s1 + $0x490] sm:$0xf]
      %v549 = vld [vmem:[%s1 + $0x494] sm:$0xf]
      %v550 = vld [vmem:[%s1 + $0x498] sm:$0xf]
      %v551 = vld [vmem:[%s1 + $0x49c] sm:$0xf]
      %v552 = vld [vmem:[%s1 + $0x4a0] sm:$0xf]
      %v553 = vld [vmem:[%s1 + $0x4a4] sm:$0xf]
      %v554 = vld [vmem:[%s1 + $0x4a8] sm:$0xf]
      %v555 = vld [vmem:[%s1 + $0x4ac] sm:$0xf]
      %v556 = vld [vmem:[%s1 + $0x4b0] sm:$0xf]
      %v557 = vld [vmem:[%s1 + $0x4b4] sm:$0xf]
      %v558 = vld [vmem:[%s1 + $0x4b8] sm:$0xf]
      %v559 = vld [vmem:[%s1 + $0x4bc] sm:$0xf]
      %v560 = vld [vmem:[%s1 + $0x4c0] sm:$0xf]
      %v561 = vld [vmem:[%s1 + $0x4c4] sm:$0xf]
      %v562 = vld [vmem:[%s1 + $0x4c8] sm:$0xf]
      %v563 = vld [vmem:[%s1 + $0x4cc] sm:$0xf]
      %v564 = vld [vmem:[%s1 + $0x4d0] sm:$0xf]
      %v565 = vld [vmem:[%s1 + $0x4d4] sm:$0xf]
      %v566 = vld [vmem:[%s1 + $0x4d8] sm:$0xf]
      %v567 = vld [vmem:[%s1 + $0x4dc] sm:$0xf]
      %v568 = vld [vmem:[%s1 + $0x4e0] sm:$0xf]
      %v569 = vld [vmem:[%s1 + $0x4e4] sm:$0xf]
      %v570 = vld [vmem:[%s1 + $0x4e8] sm:$0xf]
      %v571 = vld [vmem:[%s1 + $0x4ec] sm:$0xf]
      %v572 = vld [vmem:[%s1 + $0x4f0] sm:$0xf]
      %v573 = vld [vmem:[%s1 + $0x4f4] sm:$0xf]
      %v574 = vld [vmem:[%s1 + $0x4f8] sm:$0xf]
      %v575 = vld [vmem:[%s1 + $0x4fc] sm:$0xf]
      %v576 = vld [vmem:[%s1 + $0x500] sm:$0xf]
      %v577 = vld [vmem:[%s1 + $0x504] sm:$0xf]
      %v578 = vld [vmem:[%s1 + $0x508] sm:$0xf]
      %v579 = vld [vmem:[%s1 + $0x50c] sm:$0xf]
      %v580 = vld [vmem:[%s1 + $0x510] sm:$0xf]
      %v581 = vld [vmem:[%s1 + $0x514] sm:$0xf]
      %v582 = vld [vmem:[%s1 + $0x518] sm:$0xf]
      %v583 = vld [vmem:[%s1 + $0x51c] sm:$0xf]
      %v584 = vld [vmem:[%s1 + $0x520] sm:$0xf]
      %v585 = vld [vmem:[%s1 + $0x524] sm:$0xf]
      %v586 = vld [vmem:[%s1 + $0x528] sm:$0xf]
      %v587 = vld [vmem:[%s1 + $0x52c] sm:$0xf]
      %v588 = vld [vmem:[%s1 + $0x530] sm:$0xf]
      %v589 = vld [vmem:[%s1 + $0x534] sm:$0xf]
      %v590 = vld [vmem:[%s1 + $0x538] sm:$0xf]
      %v591 = vld [vmem:[%s1 + $0x53c] sm:$0xf]
      %v592 = vld [vmem:[%s1 + $0x540] sm:$0xf]
      %v593 = vld [vmem:[%s1 + $0x544] sm:$0xf]
      %v594 = vld [vmem:[%s1 + $0x548] sm:$0xf]
      %v595 = vld [vmem:[%s1 + $0x54c] sm:$0xf]
      %v596 = vld [vmem:[%s1 + $0x550] sm:$0xf]
      %v597 = vld [vmem:[%s1 + $0x554] sm:$0xf]
      %v598 = vld [vmem:[%s1 + $0x558] sm:$0xf]
      %v599 = vld [vmem:[%s1 + $0x55c] sm:$0xf]
      %v600 = vld [vmem:[%s1 + $0x560] sm:$0xf]
      %v601 = vld [vmem:[%s1 + $0x564] sm:$0xf]
      %v602 = vld [vmem:[%s1 + $0x568] sm:$0xf]
      %v603 = vld [vmem:[%s1 + $0x56c] sm:$0xf]
      %v604 = vld [vmem:[%s1 + $0x570] sm:$0xf]
      %v605 = vld [vmem:[%s1 + $0x574] sm:$0xf]
      %v606 = vld [vmem:[%s1 + $0x578] sm:$0xf]
      %v607 = vld [vmem:[%s1 + $0x57c] sm:$0xf]
      %v608 = vld [vmem:[%s1 + $0x580] sm:$0xf]
      %v609 = vld [vmem:[%s1 + $0x584] sm:$0xf]
      %v610 = vld [vmem:[%s1 + $0x588] sm:$0xf]
      %v611 = vld [vmem:[%s1 + $0x58c] sm:$0xf]
      %v612 = vld [vmem:[%s1 + $0x590] sm:$0xf]
      %v613 = vld [vmem:[%s1 + $0x594] sm:$0xf]
      %v614 = vld [vmem:[%s1 + $0x598] sm:$0xf]
      %v615 = vld [vmem:[%s1 + $0x59c] sm:$0xf]
      %v616 = vld [vmem:[%s1 + $0x5a0] sm:$0xf]
      %v617 = vld [vmem:[%s1 + $0x5a4] sm:$0xf]
      %v618 = vld [vmem:[%s1 + $0x5a8] sm:$0xf]
      %v619 = vld [vmem:[%s1 + $0x5ac] sm:$0xf]
      %v620 = vld [vmem:[%s1 + $0x5b0] sm:$0xf]
      %v621 = vld [vmem:[%s1 + $0x5b4] sm:$0xf]
      %v622 = vld [vmem:[%s1 + $0x5b8] sm:$0xf]
      %v623 = vld [vmem:[%s1 + $0x5bc] sm:$0xf]
      %v624 = vld [vmem:[%s1 + $0x5c0] sm:$0xf]
      %v625 = vld [vmem:[%s1 + $0x5c4] sm:$0xf]
      %v626 = vld [vmem:[%s1 + $0x5c8] sm:$0xf]
      %v627 = vld [vmem:[%s1 + $0x5cc] sm:$0xf]
      %v628 = vld [vmem:[%s1 + $0x5d0] sm:$0xf]
      %v629 = vld [vmem:[%s1 + $0x5d4] sm:$0xf]
      %v630 = vld [vmem:[%s1 + $0x5d8] sm:$0xf]
      %v631 = vld [vmem:[%s1 + $0x5dc] sm:$0xf]
      %v632 = vld [vmem:[%s1 + $0x5e0] sm:$0xf]
      %v633 = vld [vmem:[%s1 + $0x5e4] sm:$0xf]
      %v634 = vld [vmem:[%s1 + $0x5e8] sm:$0xf]
      %v635 = vld [vmem:[%s1 + $0x5ec] sm:$0xf]
      %v636 = vld [vmem:[%s1 + $0x5f0] sm:$0xf]
      %v637 = vld [vmem:[%s1 + $0x5f4] sm:$0xf]
      %v638 = vld [vmem:[%s1 + $0x5f8] sm:$0xf]
      %v639 = vld [vmem:[%s1 + $0x5fc] sm:$0xf]
      %v640 = vld [vmem:[%s2] sm:$0x1]
      %v642 = vlaneseq
      %v643 = vshrl.u32 %v642, 7
      %v644 = vsub.s32 0, %v643
      %v645 = vrot.slane %v640, %v644
      %v671 = vunpack.c.l.b16 %v232
      %v672 = vunpack.c.h.b16 %v232
      %v673 = vunpack.c.l.b16 %v233
      %v674 = vunpack.c.h.b16 %v233
      %v675 = vunpack.c.l.b16 %v234
      %v676 = vunpack.c.h.b16 %v234
      %v677 = vunpack.c.l.b16 %v235
      %v678 = vunpack.c.h.b16 %v235
      %v679 = vunpack.c.l.b16 %v236
      %v680 = vunpack.c.h.b16 %v236
      %v681 = vunpack.c.l.b16 %v237
      %v682 = vunpack.c.h.b16 %v237
      %v683 = vunpack.c.l.b16 %v238
      %v684 = vunpack.c.h.b16 %v238
      %v685 = vunpack.c.l.b16 %v239
      %v686 = vunpack.c.h.b16 %v239
      %v687 = vunpack.c.l.b16 %v240
      %v688 = vunpack.c.h.b16 %v240
      %v689 = vunpack.c.l.b16 %v241
      %v690 = vunpack.c.h.b16 %v241
      %v691 = vunpack.c.l.b16 %v242
      %v692 = vunpack.c.h.b16 %v242
      %v693 = vunpack.c.l.b16 %v243
      %v694 = vunpack.c.h.b16 %v243
      %v695 = vunpack.c.l.b16 %v244
      %v696 = vunpack.c.h.b16 %v244
      %v697 = vunpack.c.l.b16 %v245
      %v698 = vunpack.c.h.b16 %v245
      %v699 = vunpack.c.l.b16 %v246
      %v700 = vunpack.c.h.b16 %v246
      %v701 = vunpack.c.l.b16 %v247
      %v702 = vunpack.c.h.b16 %v247
      %v703 = vunpack.c.l.b16 %v248
      %v704 = vunpack.c.h.b16 %v248
      %v705 = vunpack.c.l.b16 %v249
      %v706 = vunpack.c.h.b16 %v249
      %v707 = vunpack.c.l.b16 %v250
      %v708 = vunpack.c.h.b16 %v250
      %v709 = vunpack.c.l.b16 %v251
      %v710 = vunpack.c.h.b16 %v251
      %v711 = vunpack.c.l.b16 %v252
      %v712 = vunpack.c.h.b16 %v252
      %v713 = vunpack.c.l.b16 %v253
      %v714 = vunpack.c.h.b16 %v253
      %v715 = vunpack.c.l.b16 %v254
      %v716 = vunpack.c.h.b16 %v254
      %v717 = vunpack.c.l.b16 %v255
      %v718 = vunpack.c.h.b16 %v255
      %v719 = vpack.c.b16 %v695, %v671
      %v720 = vpack.c.b16 %v696, %v672
      %v721 = vpack.c.b16 %v697, %v673
      %v722 = vpack.c.b16 %v698, %v674
      %v723 = vpack.c.b16 %v699, %v675
      %v724 = vpack.c.b16 %v700, %v676
      %v725 = vpack.c.b16 %v701, %v677
      %v726 = vpack.c.b16 %v702, %v678
      %v727 = vpack.c.b16 %v703, %v679
      %v728 = vpack.c.b16 %v704, %v680
      %v729 = vpack.c.b16 %v705, %v681
      %v730 = vpack.c.b16 %v706, %v682
      %v731 = vpack.c.b16 %v707, %v683
      %v732 = vpack.c.b16 %v708, %v684
      %v733 = vpack.c.b16 %v709, %v685
      %v734 = vpack.c.b16 %v710, %v686
      %v735 = vpack.c.b16 %v711, %v687
      %v736 = vpack.c.b16 %v712, %v688
      %v737 = vpack.c.b16 %v713, %v689
      %v738 = vpack.c.b16 %v714, %v690
      %v739 = vpack.c.b16 %v715, %v691
      %v740 = vpack.c.b16 %v716, %v692
      %v741 = vpack.c.b16 %v717, %v693
      %v742 = vpack.c.b16 %v718, %v694
      %v1151 = vunpack.c.l.b16 %v256
      %v1152 = vunpack.c.l.b16 %v257
      %v1153 = vunpack.c.l.b16 %v258
      %v1154 = vunpack.c.l.b16 %v259
      %v1155 = vunpack.c.l.b16 %v260
      %v1156 = vunpack.c.l.b16 %v261
      %v1157 = vunpack.c.l.b16 %v262
      %v1158 = vunpack.c.l.b16 %v263
      %v1159 = vunpack.c.l.b16 %v264
      %v1160 = vunpack.c.l.b16 %v265
      %v1161 = vunpack.c.l.b16 %v266
      %v1162 = vunpack.c.l.b16 %v267
      %v1163 = vunpack.c.l.b16 %v268
      %v1164 = vunpack.c.l.b16 %v269
      %v1165 = vunpack.c.l.b16 %v270
      %v1166 = vunpack.c.l.b16 %v271
      %v1167 = vunpack.c.l.b16 %v272
      %v1168 = vunpack.c.l.b16 %v273
      %v1169 = vunpack.c.l.b16 %v274
      %v1170 = vunpack.c.l.b16 %v275
      %v1171 = vunpack.c.l.b16 %v276
      %v1172 = vunpack.c.l.b16 %v277
      %v1173 = vunpack.c.l.b16 %v278
      %v1174 = vunpack.c.l.b16 %v279
      %v1175 = vunpack.c.l.b16 %v280
      %v1176 = vunpack.c.l.b16 %v281
      %v1177 = vunpack.c.l.b16 %v282
      %v1178 = vunpack.c.l.b16 %v283
      %v1179 = vunpack.c.l.b16 %v284
      %v1180 = vunpack.c.l.b16 %v285
      %v1181 = vunpack.c.l.b16 %v286
      %v1182 = vunpack.c.l.b16 %v287
      %v1183 = vunpack.c.l.b16 %v288
      %v1184 = vunpack.c.l.b16 %v289
      %v1185 = vunpack.c.l.b16 %v290
      %v1186 = vunpack.c.l.b16 %v291
      %v1187 = vunpack.c.l.b16 %v292
      %v1188 = vunpack.c.l.b16 %v293
      %v1189 = vunpack.c.l.b16 %v294
      %v1190 = vunpack.c.l.b16 %v295
      %v1191 = vunpack.c.l.b16 %v296
      %v1192 = vunpack.c.l.b16 %v297
      %v1193 = vunpack.c.l.b16 %v298
      %v1194 = vunpack.c.l.b16 %v299
      %v1195 = vunpack.c.l.b16 %v300
      %v1196 = vunpack.c.l.b16 %v301
      %v1197 = vunpack.c.l.b16 %v302
      %v1198 = vunpack.c.l.b16 %v303
      %v1199 = vunpack.c.l.b16 %v304
      %v1200 = vunpack.c.l.b16 %v305
      %v1201 = vunpack.c.l.b16 %v306
      %v1202 = vunpack.c.l.b16 %v307
      %v1203 = vunpack.c.l.b16 %v308
      %v1204 = vunpack.c.l.b16 %v309
      %v1205 = vunpack.c.l.b16 %v310
      %v1206 = vunpack.c.l.b16 %v311
      %v1207 = vunpack.c.l.b16 %v312
      %v1208 = vunpack.c.l.b16 %v313
      %v1209 = vunpack.c.l.b16 %v314
      %v1210 = vunpack.c.l.b16 %v315
      %v1211 = vunpack.c.l.b16 %v316
      %v1212 = vunpack.c.l.b16 %v317
      %v1213 = vunpack.c.l.b16 %v318
      %v1214 = vunpack.c.l.b16 %v319
      %v1215 = vunpack.c.l.b16 %v320
      %v1216 = vunpack.c.l.b16 %v321
      %v1217 = vunpack.c.l.b16 %v322
      %v1218 = vunpack.c.l.b16 %v323
      %v1219 = vunpack.c.l.b16 %v324
      %v1220 = vunpack.c.l.b16 %v325
      %v1221 = vunpack.c.l.b16 %v326
      %v1222 = vunpack.c.l.b16 %v327
      %v1223 = vunpack.c.l.b16 %v328
      %v1224 = vunpack.c.l.b16 %v329
      %v1225 = vunpack.c.l.b16 %v330
      %v1226 = vunpack.c.l.b16 %v331
      %v1227 = vunpack.c.l.b16 %v332
      %v1228 = vunpack.c.l.b16 %v333
      %v1229 = vunpack.c.l.b16 %v334
      %v1230 = vunpack.c.l.b16 %v335
      %v1231 = vunpack.c.l.b16 %v336
      %v1232 = vunpack.c.l.b16 %v337
      %v1233 = vunpack.c.l.b16 %v338
      %v1234 = vunpack.c.l.b16 %v339
      %v1235 = vunpack.c.l.b16 %v340
      %v1236 = vunpack.c.l.b16 %v341
      %v1237 = vunpack.c.l.b16 %v342
      %v1238 = vunpack.c.l.b16 %v343
      %v1239 = vunpack.c.l.b16 %v344
      %v1240 = vunpack.c.l.b16 %v345
      %v1241 = vunpack.c.l.b16 %v346
      %v1242 = vunpack.c.l.b16 %v347
      %v1243 = vunpack.c.l.b16 %v348
      %v1244 = vunpack.c.l.b16 %v349
      %v1245 = vunpack.c.l.b16 %v350
      %v1246 = vunpack.c.l.b16 %v351
      %v1247 = vunpack.c.l.b16 %v352
      %v1248 = vunpack.c.l.b16 %v353
      %v1249 = vunpack.c.l.b16 %v354
      %v1250 = vunpack.c.l.b16 %v355
      %v1251 = vunpack.c.l.b16 %v356
      %v1252 = vunpack.c.l.b16 %v357
      %v1253 = vunpack.c.l.b16 %v358
      %v1254 = vunpack.c.l.b16 %v359
      %v1255 = vunpack.c.l.b16 %v360
      %v1256 = vunpack.c.l.b16 %v361
      %v1257 = vunpack.c.l.b16 %v362
      %v1258 = vunpack.c.l.b16 %v363
      %v1259 = vunpack.c.l.b16 %v364
      %v1260 = vunpack.c.l.b16 %v365
      %v1261 = vunpack.c.l.b16 %v366
      %v1262 = vunpack.c.l.b16 %v367
      %v1263 = vunpack.c.l.b16 %v368
      %v1264 = vunpack.c.l.b16 %v369
      %v1265 = vunpack.c.l.b16 %v370
      %v1266 = vunpack.c.l.b16 %v371
      %v1267 = vunpack.c.l.b16 %v372
      %v1268 = vunpack.c.l.b16 %v373
      %v1269 = vunpack.c.l.b16 %v374
      %v1270 = vunpack.c.l.b16 %v375
      %v1271 = vunpack.c.l.b16 %v376
      %v1272 = vunpack.c.l.b16 %v377
      %v1273 = vunpack.c.l.b16 %v378
      %v1274 = vunpack.c.l.b16 %v379
      %v1275 = vunpack.c.l.b16 %v380
      %v1276 = vunpack.c.l.b16 %v381
      %v1277 = vunpack.c.l.b16 %v382
      %v1278 = vunpack.c.l.b16 %v383
      %v1279 = vunpack.c.l.b16 %v384
      %v1280 = vunpack.c.l.b16 %v385
      %v1281 = vunpack.c.l.b16 %v386
      %v1282 = vunpack.c.l.b16 %v387
      %v1283 = vunpack.c.l.b16 %v388
      %v1284 = vunpack.c.l.b16 %v389
      %v1285 = vunpack.c.l.b16 %v390
      %v1286 = vunpack.c.l.b16 %v391
      %v1287 = vunpack.c.l.b16 %v392
      %v1288 = vunpack.c.l.b16 %v393
      %v1289 = vunpack.c.l.b16 %v394
      %v1290 = vunpack.c.l.b16 %v395
      %v1291 = vunpack.c.l.b16 %v396
      %v1292 = vunpack.c.l.b16 %v397
      %v1293 = vunpack.c.l.b16 %v398
      %v1294 = vunpack.c.l.b16 %v399
      %v1295 = vunpack.c.l.b16 %v400
      %v1296 = vunpack.c.l.b16 %v401
      %v1297 = vunpack.c.l.b16 %v402
      %v1298 = vunpack.c.l.b16 %v403
      %v1299 = vunpack.c.l.b16 %v404
      %v1300 = vunpack.c.l.b16 %v405
      %v1301 = vunpack.c.l.b16 %v406
      %v1302 = vunpack.c.l.b16 %v407
      %v1303 = vunpack.c.l.b16 %v408
      %v1304 = vunpack.c.l.b16 %v409
      %v1305 = vunpack.c.l.b16 %v410
      %v1306 = vunpack.c.l.b16 %v411
      %v1307 = vunpack.c.l.b16 %v412
      %v1308 = vunpack.c.l.b16 %v413
      %v1309 = vunpack.c.l.b16 %v414
      %v1310 = vunpack.c.l.b16 %v415
      %v1311 = vunpack.c.l.b16 %v416
      %v1312 = vunpack.c.l.b16 %v417
      %v1313 = vunpack.c.l.b16 %v418
      %v1314 = vunpack.c.l.b16 %v419
      %v1315 = vunpack.c.l.b16 %v420
      %v1316 = vunpack.c.l.b16 %v421
      %v1317 = vunpack.c.l.b16 %v422
      %v1318 = vunpack.c.l.b16 %v423
      %v1319 = vunpack.c.l.b16 %v424
      %v1320 = vunpack.c.l.b16 %v425
      %v1321 = vunpack.c.l.b16 %v426
      %v1322 = vunpack.c.l.b16 %v427
      %v1323 = vunpack.c.l.b16 %v428
      %v1324 = vunpack.c.l.b16 %v429
      %v1325 = vunpack.c.l.b16 %v430
      %v1326 = vunpack.c.l.b16 %v431
      %v1327 = vunpack.c.l.b16 %v432
      %v1328 = vunpack.c.l.b16 %v433
      %v1329 = vunpack.c.l.b16 %v434
      %v1330 = vunpack.c.l.b16 %v435
      %v1331 = vunpack.c.l.b16 %v436
      %v1332 = vunpack.c.l.b16 %v437
      %v1333 = vunpack.c.l.b16 %v438
      %v1334 = vunpack.c.l.b16 %v439
      %v1335 = vunpack.c.l.b16 %v440
      %v1336 = vunpack.c.l.b16 %v441
      %v1337 = vunpack.c.l.b16 %v442
      %v1338 = vunpack.c.l.b16 %v443
      %v1339 = vunpack.c.l.b16 %v444
      %v1340 = vunpack.c.l.b16 %v445
      %v1341 = vunpack.c.l.b16 %v446
      %v1342 = vunpack.c.l.b16 %v447
      %v1343 = vunpack.c.l.b16 %v448
      %v1344 = vunpack.c.l.b16 %v449
      %v1345 = vunpack.c.l.b16 %v450
      %v1346 = vunpack.c.l.b16 %v451
      %v1347 = vunpack.c.l.b16 %v452
      %v1348 = vunpack.c.l.b16 %v453
      %v1349 = vunpack.c.l.b16 %v454
      %v1350 = vunpack.c.l.b16 %v455
      %v1351 = vunpack.c.l.b16 %v456
      %v1352 = vunpack.c.l.b16 %v457
      %v1353 = vunpack.c.l.b16 %v458
      %v1354 = vunpack.c.l.b16 %v459
      %v1355 = vunpack.c.l.b16 %v460
      %v1356 = vunpack.c.l.b16 %v461
      %v1357 = vunpack.c.l.b16 %v462
      %v1358 = vunpack.c.l.b16 %v463
      %v1359 = vunpack.c.l.b16 %v464
      %v1360 = vunpack.c.l.b16 %v465
      %v1361 = vunpack.c.l.b16 %v466
      %v1362 = vunpack.c.l.b16 %v467
      %v1363 = vunpack.c.l.b16 %v468
      %v1364 = vunpack.c.l.b16 %v469
      %v1365 = vunpack.c.l.b16 %v470
      %v1366 = vunpack.c.l.b16 %v471
      %v1367 = vunpack.c.l.b16 %v472
      %v1368 = vunpack.c.l.b16 %v473
      %v1369 = vunpack.c.l.b16 %v474
      %v1370 = vunpack.c.l.b16 %v475
      %v1371 = vunpack.c.l.b16 %v476
      %v1372 = vunpack.c.l.b16 %v477
      %v1373 = vunpack.c.l.b16 %v478
      %v1374 = vunpack.c.l.b16 %v479
      %v1375 = vunpack.c.l.b16 %v480
      %v1376 = vunpack.c.l.b16 %v481
      %v1377 = vunpack.c.l.b16 %v482
      %v1378 = vunpack.c.l.b16 %v483
      %v1379 = vunpack.c.l.b16 %v484
      %v1380 = vunpack.c.l.b16 %v485
      %v1381 = vunpack.c.l.b16 %v486
      %v1382 = vunpack.c.l.b16 %v487
      %v1383 = vunpack.c.l.b16 %v488
      %v1384 = vunpack.c.l.b16 %v489
      %v1385 = vunpack.c.l.b16 %v490
      %v1386 = vunpack.c.l.b16 %v491
      %v1387 = vunpack.c.l.b16 %v492
      %v1388 = vunpack.c.l.b16 %v493
      %v1389 = vunpack.c.l.b16 %v494
      %v1390 = vunpack.c.l.b16 %v495
      %v1391 = vunpack.c.l.b16 %v496
      %v1392 = vunpack.c.l.b16 %v497
      %v1393 = vunpack.c.l.b16 %v498
      %v1394 = vunpack.c.l.b16 %v499
      %v1395 = vunpack.c.l.b16 %v500
      %v1396 = vunpack.c.l.b16 %v501
      %v1397 = vunpack.c.l.b16 %v502
      %v1398 = vunpack.c.l.b16 %v503
      %v1399 = vunpack.c.l.b16 %v504
      %v1400 = vunpack.c.l.b16 %v505
      %v1401 = vunpack.c.l.b16 %v506
      %v1402 = vunpack.c.l.b16 %v507
      %v1403 = vunpack.c.l.b16 %v508
      %v1404 = vunpack.c.l.b16 %v509
      %v1405 = vunpack.c.l.b16 %v510
      %v1406 = vunpack.c.l.b16 %v511
      %v1407 = vunpack.c.l.b16 %v512
      %v1408 = vunpack.c.l.b16 %v513
      %v1409 = vunpack.c.l.b16 %v514
      %v1410 = vunpack.c.l.b16 %v515
      %v1411 = vunpack.c.l.b16 %v516
      %v1412 = vunpack.c.l.b16 %v517
      %v1413 = vunpack.c.l.b16 %v518
      %v1414 = vunpack.c.l.b16 %v519
      %v1415 = vunpack.c.l.b16 %v520
      %v1416 = vunpack.c.l.b16 %v521
      %v1417 = vunpack.c.l.b16 %v522
      %v1418 = vunpack.c.l.b16 %v523
      %v1419 = vunpack.c.l.b16 %v524
      %v1420 = vunpack.c.l.b16 %v525
      %v1421 = vunpack.c.l.b16 %v526
      %v1422 = vunpack.c.l.b16 %v527
      %v1423 = vunpack.c.l.b16 %v528
      %v1424 = vunpack.c.l.b16 %v529
      %v1425 = vunpack.c.l.b16 %v530
      %v1426 = vunpack.c.l.b16 %v531
      %v1427 = vunpack.c.l.b16 %v532
      %v1428 = vunpack.c.l.b16 %v533
      %v1429 = vunpack.c.l.b16 %v534
      %v1430 = vunpack.c.l.b16 %v535
      %v1431 = vunpack.c.l.b16 %v536
      %v1432 = vunpack.c.l.b16 %v537
      %v1433 = vunpack.c.l.b16 %v538
      %v1434 = vunpack.c.l.b16 %v539
      %v1435 = vunpack.c.l.b16 %v540
      %v1436 = vunpack.c.l.b16 %v541
      %v1437 = vunpack.c.l.b16 %v542
      %v1438 = vunpack.c.l.b16 %v543
      %v1439 = vunpack.c.l.b16 %v544
      %v1440 = vunpack.c.l.b16 %v545
      %v1441 = vunpack.c.l.b16 %v546
      %v1442 = vunpack.c.l.b16 %v547
      %v1443 = vunpack.c.l.b16 %v548
      %v1444 = vunpack.c.l.b16 %v549
      %v1445 = vunpack.c.l.b16 %v550
      %v1446 = vunpack.c.l.b16 %v551
      %v1447 = vunpack.c.l.b16 %v552
      %v1448 = vunpack.c.l.b16 %v553
      %v1449 = vunpack.c.l.b16 %v554
      %v1450 = vunpack.c.l.b16 %v555
      %v1451 = vunpack.c.l.b16 %v556
      %v1452 = vunpack.c.l.b16 %v557
      %v1453 = vunpack.c.l.b16 %v558
      %v1454 = vunpack.c.l.b16 %v559
      %v1455 = vunpack.c.l.b16 %v560
      %v1456 = vunpack.c.l.b16 %v561
      %v1457 = vunpack.c.l.b16 %v562
      %v1458 = vunpack.c.l.b16 %v563
      %v1459 = vunpack.c.l.b16 %v564
      %v1460 = vunpack.c.l.b16 %v565
      %v1461 = vunpack.c.l.b16 %v566
      %v1462 = vunpack.c.l.b16 %v567
      %v1463 = vunpack.c.l.b16 %v568
      %v1464 = vunpack.c.l.b16 %v569
      %v1465 = vunpack.c.l.b16 %v570
      %v1466 = vunpack.c.l.b16 %v571
      %v1467 = vunpack.c.l.b16 %v572
      %v1468 = vunpack.c.l.b16 %v573
      %v1469 = vunpack.c.l.b16 %v574
      %v1470 = vunpack.c.l.b16 %v575
      %v1471 = vunpack.c.l.b16 %v576
      %v1472 = vunpack.c.l.b16 %v577
      %v1473 = vunpack.c.l.b16 %v578
      %v1474 = vunpack.c.l.b16 %v579
      %v1475 = vunpack.c.l.b16 %v580
      %v1476 = vunpack.c.l.b16 %v581
      %v1477 = vunpack.c.l.b16 %v582
      %v1478 = vunpack.c.l.b16 %v583
      %v1479 = vunpack.c.l.b16 %v584
      %v1480 = vunpack.c.l.b16 %v585
      %v1481 = vunpack.c.l.b16 %v586
      %v1482 = vunpack.c.l.b16 %v587
      %v1483 = vunpack.c.l.b16 %v588
      %v1484 = vunpack.c.l.b16 %v589
      %v1485 = vunpack.c.l.b16 %v590
      %v1486 = vunpack.c.l.b16 %v591
      %v1487 = vunpack.c.l.b16 %v592
      %v1488 = vunpack.c.l.b16 %v593
      %v1489 = vunpack.c.l.b16 %v594
      %v1490 = vunpack.c.l.b16 %v595
      %v1491 = vunpack.c.l.b16 %v596
      %v1492 = vunpack.c.l.b16 %v597
      %v1493 = vunpack.c.l.b16 %v598
      %v1494 = vunpack.c.l.b16 %v599
      %v1495 = vunpack.c.l.b16 %v600
      %v1496 = vunpack.c.l.b16 %v601
      %v1497 = vunpack.c.l.b16 %v602
      %v1498 = vunpack.c.l.b16 %v603
      %v1499 = vunpack.c.l.b16 %v604
      %v1500 = vunpack.c.l.b16 %v605
      %v1501 = vunpack.c.l.b16 %v606
      %v1502 = vunpack.c.l.b16 %v607
      %v1503 = vunpack.c.l.b16 %v608
      %v1504 = vunpack.c.l.b16 %v609
      %v1505 = vunpack.c.l.b16 %v610
      %v1506 = vunpack.c.l.b16 %v611
      %v1507 = vunpack.c.l.b16 %v612
      %v1508 = vunpack.c.l.b16 %v613
      %v1509 = vunpack.c.l.b16 %v614
      %v1510 = vunpack.c.l.b16 %v615
      %v1511 = vunpack.c.l.b16 %v616
      %v1512 = vunpack.c.l.b16 %v617
      %v1513 = vunpack.c.l.b16 %v618
      %v1514 = vunpack.c.l.b16 %v619
      %v1515 = vunpack.c.l.b16 %v620
      %v1516 = vunpack.c.l.b16 %v621
      %v1517 = vunpack.c.l.b16 %v622
      %v1518 = vunpack.c.l.b16 %v623
      %v1519 = vunpack.c.l.b16 %v624
      %v1520 = vunpack.c.l.b16 %v625
      %v1521 = vunpack.c.l.b16 %v626
      %v1522 = vunpack.c.l.b16 %v627
      %v1523 = vunpack.c.l.b16 %v628
      %v1524 = vunpack.c.l.b16 %v629
      %v1525 = vunpack.c.l.b16 %v630
      %v1526 = vunpack.c.l.b16 %v631
      %v1527 = vunpack.c.l.b16 %v632
      %v1528 = vunpack.c.l.b16 %v633
      %v1529 = vunpack.c.l.b16 %v634
      %v1530 = vunpack.c.l.b16 %v635
      %v1531 = vunpack.c.l.b16 %v636
      %v1532 = vunpack.c.l.b16 %v637
      %v1533 = vunpack.c.l.b16 %v638
      %v1534 = vunpack.c.l.b16 %v639
      %v1535 = vpack.c.b16 %v1152, %v1151
      %v1536 = vpack.c.b16 %v1154, %v1153
      %v1537 = vpack.c.b16 %v1156, %v1155
      %v1538 = vpack.c.b16 %v1158, %v1157
      %v1539 = vpack.c.b16 %v1160, %v1159
      %v1540 = vpack.c.b16 %v1162, %v1161
      %v1541 = vpack.c.b16 %v1164, %v1163
      %v1542 = vpack.c.b16 %v1166, %v1165
      %v1543 = vpack.c.b16 %v1168, %v1167
      %v1544 = vpack.c.b16 %v1170, %v1169
      %v1545 = vpack.c.b16 %v1172, %v1171
      %v1546 = vpack.c.b16 %v1174, %v1173
      %v1547 = vpack.c.b16 %v1176, %v1175
      %v1548 = vpack.c.b16 %v1178, %v1177
      %v1549 = vpack.c.b16 %v1180, %v1179
      %v1550 = vpack.c.b16 %v1182, %v1181
      %v1551 = vpack.c.b16 %v1184, %v1183
      %v1552 = vpack.c.b16 %v1186, %v1185
      %v1553 = vpack.c.b16 %v1188, %v1187
      %v1554 = vpack.c.b16 %v1190, %v1189
      %v1555 = vpack.c.b16 %v1192, %v1191
      %v1556 = vpack.c.b16 %v1194, %v1193
      %v1557 = vpack.c.b16 %v1196, %v1195
      %v1558 = vpack.c.b16 %v1198, %v1197
      %v1559 = vpack.c.b16 %v1200, %v1199
      %v1560 = vpack.c.b16 %v1202, %v1201
      %v1561 = vpack.c.b16 %v1204, %v1203
      %v1562 = vpack.c.b16 %v1206, %v1205
      %v1563 = vpack.c.b16 %v1208, %v1207
      %v1564 = vpack.c.b16 %v1210, %v1209
      %v1565 = vpack.c.b16 %v1212, %v1211
      %v1566 = vpack.c.b16 %v1214, %v1213
      %v1567 = vpack.c.b16 %v1216, %v1215
      %v1568 = vpack.c.b16 %v1218, %v1217
      %v1569 = vpack.c.b16 %v1220, %v1219
      %v1570 = vpack.c.b16 %v1222, %v1221
      %v1571 = vpack.c.b16 %v1224, %v1223
      %v1572 = vpack.c.b16 %v1226, %v1225
      %v1573 = vpack.c.b16 %v1228, %v1227
      %v1574 = vpack.c.b16 %v1230, %v1229
      %v1575 = vpack.c.b16 %v1232, %v1231
      %v1576 = vpack.c.b16 %v1234, %v1233
      %v1577 = vpack.c.b16 %v1236, %v1235
      %v1578 = vpack.c.b16 %v1238, %v1237
      %v1579 = vpack.c.b16 %v1240, %v1239
      %v1580 = vpack.c.b16 %v1242, %v1241
      %v1581 = vpack.c.b16 %v1244, %v1243
      %v1582 = vpack.c.b16 %v1246, %v1245
      %v1583 = vpack.c.b16 %v1248, %v1247
      %v1584 = vpack.c.b16 %v1250, %v1249
      %v1585 = vpack.c.b16 %v1252, %v1251
      %v1586 = vpack.c.b16 %v1254, %v1253
      %v1587 = vpack.c.b16 %v1256, %v1255
      %v1588 = vpack.c.b16 %v1258, %v1257
      %v1589 = vpack.c.b16 %v1260, %v1259
      %v1590 = vpack.c.b16 %v1262, %v1261
      %v1591 = vpack.c.b16 %v1264, %v1263
      %v1592 = vpack.c.b16 %v1266, %v1265
      %v1593 = vpack.c.b16 %v1268, %v1267
      %v1594 = vpack.c.b16 %v1270, %v1269
      %v1595 = vpack.c.b16 %v1272, %v1271
      %v1596 = vpack.c.b16 %v1274, %v1273
      %v1597 = vpack.c.b16 %v1276, %v1275
      %v1598 = vpack.c.b16 %v1278, %v1277
      %v1599 = vpack.c.b16 %v1280, %v1279
      %v1600 = vpack.c.b16 %v1282, %v1281
      %v1601 = vpack.c.b16 %v1284, %v1283
      %v1602 = vpack.c.b16 %v1286, %v1285
      %v1603 = vpack.c.b16 %v1288, %v1287
      %v1604 = vpack.c.b16 %v1290, %v1289
      %v1605 = vpack.c.b16 %v1292, %v1291
      %v1606 = vpack.c.b16 %v1294, %v1293
      %v1607 = vpack.c.b16 %v1296, %v1295
      %v1608 = vpack.c.b16 %v1298, %v1297
      %v1609 = vpack.c.b16 %v1300, %v1299
      %v1610 = vpack.c.b16 %v1302, %v1301
      %v1611 = vpack.c.b16 %v1304, %v1303
      %v1612 = vpack.c.b16 %v1306, %v1305
      %v1613 = vpack.c.b16 %v1308, %v1307
      %v1614 = vpack.c.b16 %v1310, %v1309
      %v1615 = vpack.c.b16 %v1312, %v1311
      %v1616 = vpack.c.b16 %v1314, %v1313
      %v1617 = vpack.c.b16 %v1316, %v1315
      %v1618 = vpack.c.b16 %v1318, %v1317
      %v1619 = vpack.c.b16 %v1320, %v1319
      %v1620 = vpack.c.b16 %v1322, %v1321
      %v1621 = vpack.c.b16 %v1324, %v1323
      %v1622 = vpack.c.b16 %v1326, %v1325
      %v1623 = vpack.c.b16 %v1328, %v1327
      %v1624 = vpack.c.b16 %v1330, %v1329
      %v1625 = vpack.c.b16 %v1332, %v1331
      %v1626 = vpack.c.b16 %v1334, %v1333
      %v1627 = vpack.c.b16 %v1336, %v1335
      %v1628 = vpack.c.b16 %v1338, %v1337
      %v1629 = vpack.c.b16 %v1340, %v1339
      %v1630 = vpack.c.b16 %v1342, %v1341
      %v1631 = vpack.c.b16 %v1344, %v1343
      %v1632 = vpack.c.b16 %v1346, %v1345
      %v1633 = vpack.c.b16 %v1348, %v1347
      %v1634 = vpack.c.b16 %v1350, %v1349
      %v1635 = vpack.c.b16 %v1352, %v1351
      %v1636 = vpack.c.b16 %v1354, %v1353
      %v1637 = vpack.c.b16 %v1356, %v1355
      %v1638 = vpack.c.b16 %v1358, %v1357
      %v1639 = vpack.c.b16 %v1360, %v1359
      %v1640 = vpack.c.b16 %v1362, %v1361
      %v1641 = vpack.c.b16 %v1364, %v1363
      %v1642 = vpack.c.b16 %v1366, %v1365
      %v1643 = vpack.c.b16 %v1368, %v1367
      %v1644 = vpack.c.b16 %v1370, %v1369
      %v1645 = vpack.c.b16 %v1372, %v1371
      %v1646 = vpack.c.b16 %v1374, %v1373
      %v1647 = vpack.c.b16 %v1376, %v1375
      %v1648 = vpack.c.b16 %v1378, %v1377
      %v1649 = vpack.c.b16 %v1380, %v1379
      %v1650 = vpack.c.b16 %v1382, %v1381
      %v1651 = vpack.c.b16 %v1384, %v1383
      %v1652 = vpack.c.b16 %v1386, %v1385
      %v1653 = vpack.c.b16 %v1388, %v1387
      %v1654 = vpack.c.b16 %v1390, %v1389
      %v1655 = vpack.c.b16 %v1392, %v1391
      %v1656 = vpack.c.b16 %v1394, %v1393
      %v1657 = vpack.c.b16 %v1396, %v1395
      %v1658 = vpack.c.b16 %v1398, %v1397
      %v1659 = vpack.c.b16 %v1400, %v1399
      %v1660 = vpack.c.b16 %v1402, %v1401
      %v1661 = vpack.c.b16 %v1404, %v1403
      %v1662 = vpack.c.b16 %v1406, %v1405
      %v1663 = vpack.c.b16 %v1408, %v1407
      %v1664 = vpack.c.b16 %v1410, %v1409
      %v1665 = vpack.c.b16 %v1412, %v1411
      %v1666 = vpack.c.b16 %v1414, %v1413
      %v1667 = vpack.c.b16 %v1416, %v1415
      %v1668 = vpack.c.b16 %v1418, %v1417
      %v1669 = vpack.c.b16 %v1420, %v1419
      %v1670 = vpack.c.b16 %v1422, %v1421
      %v1671 = vpack.c.b16 %v1424, %v1423
      %v1672 = vpack.c.b16 %v1426, %v1425
      %v1673 = vpack.c.b16 %v1428, %v1427
      %v1674 = vpack.c.b16 %v1430, %v1429
      %v1675 = vpack.c.b16 %v1432, %v1431
      %v1676 = vpack.c.b16 %v1434, %v1433
      %v1677 = vpack.c.b16 %v1436, %v1435
      %v1678 = vpack.c.b16 %v1438, %v1437
      %v1679 = vpack.c.b16 %v1440, %v1439
      %v1680 = vpack.c.b16 %v1442, %v1441
      %v1681 = vpack.c.b16 %v1444, %v1443
      %v1682 = vpack.c.b16 %v1446, %v1445
      %v1683 = vpack.c.b16 %v1448, %v1447
      %v1684 = vpack.c.b16 %v1450, %v1449
      %v1685 = vpack.c.b16 %v1452, %v1451
      %v1686 = vpack.c.b16 %v1454, %v1453
      %v1687 = vpack.c.b16 %v1456, %v1455
      %v1688 = vpack.c.b16 %v1458, %v1457
      %v1689 = vpack.c.b16 %v1460, %v1459
      %v1690 = vpack.c.b16 %v1462, %v1461
      %v1691 = vpack.c.b16 %v1464, %v1463
      %v1692 = vpack.c.b16 %v1466, %v1465
      %v1693 = vpack.c.b16 %v1468, %v1467
      %v1694 = vpack.c.b16 %v1470, %v1469
      %v1695 = vpack.c.b16 %v1472, %v1471
      %v1696 = vpack.c.b16 %v1474, %v1473
      %v1697 = vpack.c.b16 %v1476, %v1475
      %v1698 = vpack.c.b16 %v1478, %v1477
      %v1699 = vpack.c.b16 %v1480, %v1479
      %v1700 = vpack.c.b16 %v1482, %v1481
      %v1701 = vpack.c.b16 %v1484, %v1483
      %v1702 = vpack.c.b16 %v1486, %v1485
      %v1703 = vpack.c.b16 %v1488, %v1487
      %v1704 = vpack.c.b16 %v1490, %v1489
      %v1705 = vpack.c.b16 %v1492, %v1491
      %v1706 = vpack.c.b16 %v1494, %v1493
      %v1707 = vpack.c.b16 %v1496, %v1495
      %v1708 = vpack.c.b16 %v1498, %v1497
      %v1709 = vpack.c.b16 %v1500, %v1499
      %v1710 = vpack.c.b16 %v1502, %v1501
      %v1711 = vpack.c.b16 %v1504, %v1503
      %v1712 = vpack.c.b16 %v1506, %v1505
      %v1713 = vpack.c.b16 %v1508, %v1507
      %v1714 = vpack.c.b16 %v1510, %v1509
      %v1715 = vpack.c.b16 %v1512, %v1511
      %v1716 = vpack.c.b16 %v1514, %v1513
      %v1717 = vpack.c.b16 %v1516, %v1515
      %v1718 = vpack.c.b16 %v1518, %v1517
      %v1719 = vpack.c.b16 %v1520, %v1519
      %v1720 = vpack.c.b16 %v1522, %v1521
      %v1721 = vpack.c.b16 %v1524, %v1523
      %v1722 = vpack.c.b16 %v1526, %v1525
      %v1723 = vpack.c.b16 %v1528, %v1527
      %v1724 = vpack.c.b16 %v1530, %v1529
      %v1725 = vpack.c.b16 %v1532, %v1531
      %v1726 = vpack.c.b16 %v1534, %v1533
      %1919 = vmatprep.subr.bf16.mxu0 0
      %1920 = vmatpush1.bf16.msra.mxu0 %v1535
      %1921 = vmatprep.subr.bf16.mxu0 0
      %1922 = vmatpush1.bf16.msra.mxu0 %v1536
      %1923 = vmatprep.subr.bf16.mxu0 0
      %1924 = vmatpush1.bf16.msra.mxu0 %v1537
      %1925 = vmatprep.subr.bf16.mxu0 0
      %1926 = vmatpush1.bf16.msra.mxu0 %v1538
      %1927 = vmatprep.subr.bf16.mxu0 0
      %1928 = vmatpush1.bf16.msra.mxu0 %v1539
      %1929 = vmatprep.subr.bf16.mxu0 0
      %1930 = vmatpush1.bf16.msra.mxu0 %v1540
      %1931 = vmatprep.subr.bf16.mxu0 0
      %1932 = vmatpush1.bf16.msra.mxu0 %v1541
      %1933 = vmatprep.subr.bf16.mxu0 0
      %1934 = vmatpush1.bf16.msra.mxu0 %v1542
      %1935 = vmatprep.subr.bf16.mxu0 0
      %1936 = vmatpush1.bf16.msra.mxu0 %v1543
      %1937 = vmatprep.subr.bf16.mxu0 0
      %1938 = vmatpush1.bf16.msra.mxu0 %v1544
      %1939 = vmatprep.subr.bf16.mxu0 0
      %1940 = vmatpush1.bf16.msra.mxu0 %v1545
      %1941 = vmatprep.subr.bf16.mxu0 0
      %1942 = vmatpush1.bf16.msra.mxu0 %v1546
      %1943 = vmatprep.subr.bf16.mxu0 0
      %1944 = vmatpush1.bf16.msra.mxu0 %v1547
      %1945 = vmatprep.subr.bf16.mxu0 0
      %1946 = vmatpush1.bf16.msra.mxu0 %v1548
      %1947 = vmatprep.subr.bf16.mxu0 0
      %1948 = vmatpush1.bf16.msra.mxu0 %v1549
      %1949 = vmatprep.subr.bf16.mxu0 0
      %1950 = vmatpush1.bf16.msra.mxu0 %v1550
      %1951 = vmatprep.mubr.bf16.mxu0 %v720
      %1952 = vmatmul.mubr.bf16.gmra.mrb[0].mxu0 %v719
      %v1953 = vpop.f32.mrb[0].mxu0
      %v1954 = vadd.f32 %v645, %v1953
      %v1955 = vpop.f32.mrb[0].mxu0
      %v1956 = vpop.f32.mrb[0].mxu0
      %v1957 = vadd.f32 %v645, %v1956
      %v1958 = vpop.f32.mrb[0].mxu0
      %1959 = vdwg.mxu0
      %1960 = vmatprep.subr.bf16.mxu0 0
      %1961 = vmatpush1.bf16.msra.mxu0 %v1551
      %1962 = vmatprep.subr.bf16.mxu0 0
      %1963 = vmatpush1.bf16.msra.mxu0 %v1552
      %1964 = vmatprep.subr.bf16.mxu0 0
      %1965 = vmatpush1.bf16.msra.mxu0 %v1553
      %1966 = vmatprep.subr.bf16.mxu0 0
      %1967 = vmatpush1.bf16.msra.mxu0 %v1554
      %1968 = vmatprep.subr.bf16.mxu0 0
      %1969 = vmatpush1.bf16.msra.mxu0 %v1555
      %1970 = vmatprep.subr.bf16.mxu0 0
      %1971 = vmatpush1.bf16.msra.mxu0 %v1556
      %1972 = vmatprep.subr.bf16.mxu0 0
      %1973 = vmatpush1.bf16.msra.mxu0 %v1557
      %1974 = vmatprep.subr.bf16.mxu0 0
      %1975 = vmatpush1.bf16.msra.mxu0 %v1558
      %1976 = vmatprep.subr.bf16.mxu0 0
      %1977 = vmatpush1.bf16.msra.mxu0 %v1559
      %1978 = vmatprep.subr.bf16.mxu0 0
      %1979 = vmatpush1.bf16.msra.mxu0 %v1560
      %1980 = vmatprep.subr.bf16.mxu0 0
      %1981 = vmatpush1.bf16.msra.mxu0 %v1561
      %1982 = vmatprep.subr.bf16.mxu0 0
      %1983 = vmatpush1.bf16.msra.mxu0 %v1562
      %1984 = vmatprep.subr.bf16.mxu0 0
      %1985 = vmatpush1.bf16.msra.mxu0 %v1563
      %1986 = vmatprep.subr.bf16.mxu0 0
      %1987 = vmatpush1.bf16.msra.mxu0 %v1564
      %1988 = vmatprep.subr.bf16.mxu0 0
      %1989 = vmatpush1.bf16.msra.mxu0 %v1565
      %1990 = vmatprep.subr.bf16.mxu0 0
      %1991 = vmatpush1.bf16.msra.mxu0 %v1566
      %1992 = vmatprep.mubr.bf16.mxu0 %v722
      %1993 = vmatmul.mubr.bf16.gmra.mrb[0].mxu0 %v721
      %v1994 = vpop.f32.mrb[0].mxu0
      %v1995 = vadd.f32 %v1954, %v1994
      %v1996 = vpop.f32.mrb[0].mxu0
      %v1997 = vpop.f32.mrb[0].mxu0
      %v1998 = vadd.f32 %v1957, %v1997
      %v1999 = vpop.f32.mrb[0].mxu0
      %2000 = vdwg.mxu0
      %2001 = vmatprep.subr.bf16.mxu0 0
      %2002 = vmatpush1.bf16.msra.mxu0 %v1567
      %2003 = vmatprep.subr.bf16.mxu0 0
      %2004 = vmatpush1.bf16.msra.mxu0 %v1568
      %2005 = vmatprep.subr.bf16.mxu0 0
      %2006 = vmatpush1.bf16.msra.mxu0 %v1569
      %2007 = vmatprep.subr.bf16.mxu0 0
      %2008 = vmatpush1.bf16.msra.mxu0 %v1570
      %2009 = vmatprep.subr.bf16.mxu0 0
      %2010 = vmatpush1.bf16.msra.mxu0 %v1571
      %2011 = vmatprep.subr.bf16.mxu0 0
      %2012 = vmatpush1.bf16.msra.mxu0 %v1572
      %2013 = vmatprep.subr.bf16.mxu0 0
      %2014 = vmatpush1.bf16.msra.mxu0 %v1573
      %2015 = vmatprep.subr.bf16.mxu0 0
      %2016 = vmatpush1.bf16.msra.mxu0 %v1574
      %2017 = vmatprep.subr.bf16.mxu0 0
      %2018 = vmatpush1.bf16.msra.mxu0 %v1575
      %2019 = vmatprep.subr.bf16.mxu0 0
      %2020 = vmatpush1.bf16.msra.mxu0 %v1576
      %2021 = vmatprep.subr.bf16.mxu0 0
      %2022 = vmatpush1.bf16.msra.mxu0 %v1577
      %2023 = vmatprep.subr.bf16.mxu0 0
      %2024 = vmatpush1.bf16.msra.mxu0 %v1578
      %2025 = vmatprep.subr.bf16.mxu0 0
      %2026 = vmatpush1.bf16.msra.mxu0 %v1579
      %2027 = vmatprep.subr.bf16.mxu0 0
      %2028 = vmatpush1.bf16.msra.mxu0 %v1580
      %2029 = vmatprep.subr.bf16.mxu0 0
      %2030 = vmatpush1.bf16.msra.mxu0 %v1581
      %2031 = vmatprep.subr.bf16.mxu0 0
      %2032 = vmatpush1.bf16.msra.mxu0 %v1582
      %2033 = vmatprep.mubr.bf16.mxu0 %v724
      %2034 = vmatmul.mubr.bf16.gmra.mrb[0].mxu0 %v723
      %v2035 = vpop.f32.mrb[0].mxu0
      %v2036 = vadd.f32 %v1995, %v2035
      %v2037 = vpop.f32.mrb[0].mxu0
      %v2038 = vpop.f32.mrb[0].mxu0
      %v2039 = vadd.f32 %v1998, %v2038
      %v2040 = vpop.f32.mrb[0].mxu0
      %2041 = vdwg.mxu0
      %2042 = vmatprep.subr.bf16.mxu0 0
      %2043 = vmatpush1.bf16.msra.mxu0 %v1583
      %2044 = vmatprep.subr.bf16.mxu0 0
      %2045 = vmatpush1.bf16.msra.mxu0 %v1584
      %2046 = vmatprep.subr.bf16.mxu0 0
      %2047 = vmatpush1.bf16.msra.mxu0 %v1585
      %2048 = vmatprep.subr.bf16.mxu0 0
      %2049 = vmatpush1.bf16.msra.mxu0 %v1586
      %2050 = vmatprep.subr.bf16.mxu0 0
      %2051 = vmatpush1.bf16.msra.mxu0 %v1587
      %2052 = vmatprep.subr.bf16.mxu0 0
      %2053 = vmatpush1.bf16.msra.mxu0 %v1588
      %2054 = vmatprep.subr.bf16.mxu0 0
      %2055 = vmatpush1.bf16.msra.mxu0 %v1589
      %2056 = vmatprep.subr.bf16.mxu0 0
      %2057 = vmatpush1.bf16.msra.mxu0 %v1590
      %2058 = vmatprep.subr.bf16.mxu0 0
      %2059 = vmatpush1.bf16.msra.mxu0 %v1591
      %2060 = vmatprep.subr.bf16.mxu0 0
      %2061 = vmatpush1.bf16.msra.mxu0 %v1592
      %2062 = vmatprep.subr.bf16.mxu0 0
      %2063 = vmatpush1.bf16.msra.mxu0 %v1593
      %2064 = vmatprep.subr.bf16.mxu0 0
      %2065 = vmatpush1.bf16.msra.mxu0 %v1594
      %2066 = vmatprep.subr.bf16.mxu0 0
      %2067 = vmatpush1.bf16.msra.mxu0 %v1595
      %2068 = vmatprep.subr.bf16.mxu0 0
      %2069 = vmatpush1.bf16.msra.mxu0 %v1596
      %2070 = vmatprep.subr.bf16.mxu0 0
      %2071 = vmatpush1.bf16.msra.mxu0 %v1597
      %2072 = vmatprep.subr.bf16.mxu0 0
      %2073 = vmatpush1.bf16.msra.mxu0 %v1598
      %2074 = vmatprep.mubr.bf16.mxu0 %v726
      %2075 = vmatmul.mubr.bf16.gmra.mrb[0].mxu0 %v725
      %v2076 = vpop.f32.mrb[0].mxu0
      %v2077 = vadd.f32 %v2036, %v2076
      %v2078 = vpop.f32.mrb[0].mxu0
      %v2079 = vpop.f32.mrb[0].mxu0
      %v2080 = vadd.f32 %v2039, %v2079
      %v2081 = vpop.f32.mrb[0].mxu0
      %2082 = vdwg.mxu0
      %2083 = vmatprep.subr.bf16.mxu0 0
      %2084 = vmatpush1.bf16.msra.mxu0 %v1599
      %2085 = vmatprep.subr.bf16.mxu0 0
      %2086 = vmatpush1.bf16.msra.mxu0 %v1600
      %2087 = vmatprep.subr.bf16.mxu0 0
      %2088 = vmatpush1.bf16.msra.mxu0 %v1601
      %2089 = vmatprep.subr.bf16.mxu0 0
      %2090 = vmatpush1.bf16.msra.mxu0 %v1602
      %2091 = vmatprep.subr.bf16.mxu0 0
      %2092 = vmatpush1.bf16.msra.mxu0 %v1603
      %2093 = vmatprep.subr.bf16.mxu0 0
      %2094 = vmatpush1.bf16.msra.mxu0 %v1604
      %2095 = vmatprep.subr.bf16.mxu0 0
      %2096 = vmatpush1.bf16.msra.mxu0 %v1605
      %2097 = vmatprep.subr.bf16.mxu0 0
      %2098 = vmatpush1.bf16.msra.mxu0 %v1606
      %2099 = vmatprep.subr.bf16.mxu0 0
      %2100 = vmatpush1.bf16.msra.mxu0 %v1607
      %2101 = vmatprep.subr.bf16.mxu0 0
      %2102 = vmatpush1.bf16.msra.mxu0 %v1608
      %2103 = vmatprep.subr.bf16.mxu0 0
      %2104 = vmatpush1.bf16.msra.mxu0 %v1609
      %2105 = vmatprep.subr.bf16.mxu0 0
      %2106 = vmatpush1.bf16.msra.mxu0 %v1610
      %2107 = vmatprep.subr.bf16.mxu0 0
      %2108 = vmatpush1.bf16.msra.mxu0 %v1611
      %2109 = vmatprep.subr.bf16.mxu0 0
      %2110 = vmatpush1.bf16.msra.mxu0 %v1612
      %2111 = vmatprep.subr.bf16.mxu0 0
      %2112 = vmatpush1.bf16.msra.mxu0 %v1613
      %2113 = vmatprep.subr.bf16.mxu0 0
      %2114 = vmatpush1.bf16.msra.mxu0 %v1614
      %2115 = vmatprep.mubr.bf16.mxu0 %v728
      %2116 = vmatmul.mubr.bf16.gmra.mrb[0].mxu0 %v727
      %v2117 = vpop.f32.mrb[0].mxu0
      %v2118 = vadd.f32 %v2077, %v2117
      %v2119 = vpop.f32.mrb[0].mxu0
      %v2120 = vpop.f32.mrb[0].mxu0
      %v2121 = vadd.f32 %v2080, %v2120
      %v2122 = vpop.f32.mrb[0].mxu0
      %2123 = vdwg.mxu0
      %2124 = vmatprep.subr.bf16.mxu0 0
      %2125 = vmatpush1.bf16.msra.mxu0 %v1615
      %2126 = vmatprep.subr.bf16.mxu0 0
      %2127 = vmatpush1.bf16.msra.mxu0 %v1616
      %2128 = vmatprep.subr.bf16.mxu0 0
      %2129 = vmatpush1.bf16.msra.mxu0 %v1617
      %2130 = vmatprep.subr.bf16.mxu0 0
      %2131 = vmatpush1.bf16.msra.mxu0 %v1618
      %2132 = vmatprep.subr.bf16.mxu0 0
      %2133 = vmatpush1.bf16.msra.mxu0 %v1619
      %2134 = vmatprep.subr.bf16.mxu0 0
      %2135 = vmatpush1.bf16.msra.mxu0 %v1620
      %2136 = vmatprep.subr.bf16.mxu0 0
      %2137 = vmatpush1.bf16.msra.mxu0 %v1621
      %2138 = vmatprep.subr.bf16.mxu0 0
      %2139 = vmatpush1.bf16.msra.mxu0 %v1622
      %2140 = vmatprep.subr.bf16.mxu0 0
      %2141 = vmatpush1.bf16.msra.mxu0 %v1623
      %2142 = vmatprep.subr.bf16.mxu0 0
      %2143 = vmatpush1.bf16.msra.mxu0 %v1624
      %2144 = vmatprep.subr.bf16.mxu0 0
      %2145 = vmatpush1.bf16.msra.mxu0 %v1625
      %2146 = vmatprep.subr.bf16.mxu0 0
      %2147 = vmatpush1.bf16.msra.mxu0 %v1626
      %2148 = vmatprep.subr.bf16.mxu0 0
      %2149 = vmatpush1.bf16.msra.mxu0 %v1627
      %2150 = vmatprep.subr.bf16.mxu0 0
      %2151 = vmatpush1.bf16.msra.mxu0 %v1628
      %2152 = vmatprep.subr.bf16.mxu0 0
      %2153 = vmatpush1.bf16.msra.mxu0 %v1629
      %2154 = vmatprep.subr.bf16.mxu0 0
      %2155 = vmatpush1.bf16.msra.mxu0 %v1630
      %2156 = vmatprep.mubr.bf16.mxu0 %v730
      %2157 = vmatmul.mubr.bf16.gmra.mrb[0].mxu0 %v729
      %v2158 = vpop.f32.mrb[0].mxu0
      %v2159 = vadd.f32 %v2118, %v2158
      %v2160 = vpop.f32.mrb[0].mxu0
      %v2161 = vpop.f32.mrb[0].mxu0
      %v2162 = vadd.f32 %v2121, %v2161
      %v2163 = vpop.f32.mrb[0].mxu0
      %2164 = vdwg.mxu0
      %2165 = vmatprep.subr.bf16.mxu0 0
      %2166 = vmatpush1.bf16.msra.mxu0 %v1631
      %2167 = vmatprep.subr.bf16.mxu0 0
      %2168 = vmatpush1.bf16.msra.mxu0 %v1632
      %2169 = vmatprep.subr.bf16.mxu0 0
      %2170 = vmatpush1.bf16.msra.mxu0 %v1633
      %2171 = vmatprep.subr.bf16.mxu0 0
      %2172 = vmatpush1.bf16.msra.mxu0 %v1634
      %2173 = vmatprep.subr.bf16.mxu0 0
      %2174 = vmatpush1.bf16.msra.mxu0 %v1635
      %2175 = vmatprep.subr.bf16.mxu0 0
      %2176 = vmatpush1.bf16.msra.mxu0 %v1636
      %2177 = vmatprep.subr.bf16.mxu0 0
      %2178 = vmatpush1.bf16.msra.mxu0 %v1637
      %2179 = vmatprep.subr.bf16.mxu0 0
      %2180 = vmatpush1.bf16.msra.mxu0 %v1638
      %2181 = vmatprep.subr.bf16.mxu0 0
      %2182 = vmatpush1.bf16.msra.mxu0 %v1639
      %2183 = vmatprep.subr.bf16.mxu0 0
      %2184 = vmatpush1.bf16.msra.mxu0 %v1640
      %2185 = vmatprep.subr.bf16.mxu0 0
      %2186 = vmatpush1.bf16.msra.mxu0 %v1641
      %2187 = vmatprep.subr.bf16.mxu0 0
      %2188 = vmatpush1.bf16.msra.mxu0 %v1642
      %2189 = vmatprep.subr.bf16.mxu0 0
      %2190 = vmatpush1.bf16.msra.mxu0 %v1643
      %2191 = vmatprep.subr.bf16.mxu0 0
      %2192 = vmatpush1.bf16.msra.mxu0 %v1644
      %2193 = vmatprep.subr.bf16.mxu0 0
      %2194 = vmatpush1.bf16.msra.mxu0 %v1645
      %2195 = vmatprep.subr.bf16.mxu0 0
      %2196 = vmatpush1.bf16.msra.mxu0 %v1646
      %2197 = vmatprep.mubr.bf16.mxu0 %v732
      %2198 = vmatmul.mubr.bf16.gmra.mrb[0].mxu0 %v731
      %v2199 = vpop.f32.mrb[0].mxu0
      %v2200 = vadd.f32 %v2159, %v2199
      %v2201 = vpop.f32.mrb[0].mxu0
      %v2202 = vpop.f32.mrb[0].mxu0
      %v2203 = vadd.f32 %v2162, %v2202
      %v2204 = vpop.f32.mrb[0].mxu0
      %2205 = vdwg.mxu0
      %2206 = vmatprep.subr.bf16.mxu0 0
      %2207 = vmatpush1.bf16.msra.mxu0 %v1647
      %2208 = vmatprep.subr.bf16.mxu0 0
      %2209 = vmatpush1.bf16.msra.mxu0 %v1648
      %2210 = vmatprep.subr.bf16.mxu0 0
      %2211 = vmatpush1.bf16.msra.mxu0 %v1649
      %2212 = vmatprep.subr.bf16.mxu0 0
      %2213 = vmatpush1.bf16.msra.mxu0 %v1650
      %2214 = vmatprep.subr.bf16.mxu0 0
      %2215 = vmatpush1.bf16.msra.mxu0 %v1651
      %2216 = vmatprep.subr.bf16.mxu0 0
      %2217 = vmatpush1.bf16.msra.mxu0 %v1652
      %2218 = vmatprep.subr.bf16.mxu0 0
      %2219 = vmatpush1.bf16.msra.mxu0 %v1653
      %2220 = vmatprep.subr.bf16.mxu0 0
      %2221 = vmatpush1.bf16.msra.mxu0 %v1654
      %2222 = vmatprep.subr.bf16.mxu0 0
      %2223 = vmatpush1.bf16.msra.mxu0 %v1655
      %2224 = vmatprep.subr.bf16.mxu0 0
      %2225 = vmatpush1.bf16.msra.mxu0 %v1656
      %2226 = vmatprep.subr.bf16.mxu0 0
      %2227 = vmatpush1.bf16.msra.mxu0 %v1657
      %2228 = vmatprep.subr.bf16.mxu0 0
      %2229 = vmatpush1.bf16.msra.mxu0 %v1658
      %2230 = vmatprep.subr.bf16.mxu0 0
      %2231 = vmatpush1.bf16.msra.mxu0 %v1659
      %2232 = vmatprep.subr.bf16.mxu0 0
      %2233 = vmatpush1.bf16.msra.mxu0 %v1660
      %2234 = vmatprep.subr.bf16.mxu0 0
      %2235 = vmatpush1.bf16.msra.mxu0 %v1661
      %2236 = vmatprep.subr.bf16.mxu0 0
      %2237 = vmatpush1.bf16.msra.mxu0 %v1662
      %2238 = vmatprep.mubr.bf16.mxu0 %v734
      %2239 = vmatmul.mubr.bf16.gmra.mrb[0].mxu0 %v733
      %v2240 = vpop.f32.mrb[0].mxu0
      %v2241 = vadd.f32 %v2200, %v2240
      %v2242 = vpop.f32.mrb[0].mxu0
      %v2243 = vpop.f32.mrb[0].mxu0
      %v2244 = vadd.f32 %v2203, %v2243
      %v2245 = vpop.f32.mrb[0].mxu0
      %2246 = vdwg.mxu0
      %2247 = vmatprep.subr.bf16.mxu0 0
      %2248 = vmatpush1.bf16.msra.mxu0 %v1663
      %2249 = vmatprep.subr.bf16.mxu0 0
      %2250 = vmatpush1.bf16.msra.mxu0 %v1664
      %2251 = vmatprep.subr.bf16.mxu0 0
      %2252 = vmatpush1.bf16.msra.mxu0 %v1665
      %2253 = vmatprep.subr.bf16.mxu0 0
      %2254 = vmatpush1.bf16.msra.mxu0 %v1666
      %2255 = vmatprep.subr.bf16.mxu0 0
      %2256 = vmatpush1.bf16.msra.mxu0 %v1667
      %2257 = vmatprep.subr.bf16.mxu0 0
      %2258 = vmatpush1.bf16.msra.mxu0 %v1668
      %2259 = vmatprep.subr.bf16.mxu0 0
      %2260 = vmatpush1.bf16.msra.mxu0 %v1669
      %2261 = vmatprep.subr.bf16.mxu0 0
      %2262 = vmatpush1.bf16.msra.mxu0 %v1670
      %2263 = vmatprep.subr.bf16.mxu0 0
      %2264 = vmatpush1.bf16.msra.mxu0 %v1671
      %2265 = vmatprep.subr.bf16.mxu0 0
      %2266 = vmatpush1.bf16.msra.mxu0 %v1672
      %2267 = vmatprep.subr.bf16.mxu0 0
      %2268 = vmatpush1.bf16.msra.mxu0 %v1673
      %2269 = vmatprep.subr.bf16.mxu0 0
      %2270 = vmatpush1.bf16.msra.mxu0 %v1674
      %2271 = vmatprep.subr.bf16.mxu0 0
      %2272 = vmatpush1.bf16.msra.mxu0 %v1675
      %2273 = vmatprep.subr.bf16.mxu0 0
      %2274 = vmatpush1.bf16.msra.mxu0 %v1676
      %2275 = vmatprep.subr.bf16.mxu0 0
      %2276 = vmatpush1.bf16.msra.mxu0 %v1677
      %2277 = vmatprep.subr.bf16.mxu0 0
      %2278 = vmatpush1.bf16.msra.mxu0 %v1678
      %2279 = vmatprep.mubr.bf16.mxu0 %v736
      %2280 = vmatmul.mubr.bf16.gmra.mrb[0].mxu0 %v735
      %v2281 = vpop.f32.mrb[0].mxu0
      %v2282 = vadd.f32 %v2241, %v2281
      %v2283 = vpop.f32.mrb[0].mxu0
      %v2284 = vpop.f32.mrb[0].mxu0
      %v2285 = vadd.f32 %v2244, %v2284
      %v2286 = vpop.f32.mrb[0].mxu0
      %2287 = vdwg.mxu0
      %2288 = vmatprep.subr.bf16.mxu0 0
      %2289 = vmatpush1.bf16.msra.mxu0 %v1679
      %2290 = vmatprep.subr.bf16.mxu0 0
      %2291 = vmatpush1.bf16.msra.mxu0 %v1680
      %2292 = vmatprep.subr.bf16.mxu0 0
      %2293 = vmatpush1.bf16.msra.mxu0 %v1681
      %2294 = vmatprep.subr.bf16.mxu0 0
      %2295 = vmatpush1.bf16.msra.mxu0 %v1682
      %2296 = vmatprep.subr.bf16.mxu0 0
      %2297 = vmatpush1.bf16.msra.mxu0 %v1683
      %2298 = vmatprep.subr.bf16.mxu0 0
      %2299 = vmatpush1.bf16.msra.mxu0 %v1684
      %2300 = vmatprep.subr.bf16.mxu0 0
      %2301 = vmatpush1.bf16.msra.mxu0 %v1685
      %2302 = vmatprep.subr.bf16.mxu0 0
      %2303 = vmatpush1.bf16.msra.mxu0 %v1686
      %2304 = vmatprep.subr.bf16.mxu0 0
      %2305 = vmatpush1.bf16.msra.mxu0 %v1687
      %2306 = vmatprep.subr.bf16.mxu0 0
      %2307 = vmatpush1.bf16.msra.mxu0 %v1688
      %2308 = vmatprep.subr.bf16.mxu0 0
      %2309 = vmatpush1.bf16.msra.mxu0 %v1689
      %2310 = vmatprep.subr.bf16.mxu0 0
      %2311 = vmatpush1.bf16.msra.mxu0 %v1690
      %2312 = vmatprep.subr.bf16.mxu0 0
      %2313 = vmatpush1.bf16.msra.mxu0 %v1691
      %2314 = vmatprep.subr.bf16.mxu0 0
      %2315 = vmatpush1.bf16.msra.mxu0 %v1692
      %2316 = vmatprep.subr.bf16.mxu0 0
      %2317 = vmatpush1.bf16.msra.mxu0 %v1693
      %2318 = vmatprep.subr.bf16.mxu0 0
      %2319 = vmatpush1.bf16.msra.mxu0 %v1694
      %2320 = vmatprep.mubr.bf16.mxu0 %v738
      %2321 = vmatmul.mubr.bf16.gmra.mrb[0].mxu0 %v737
      %v2322 = vpop.f32.mrb[0].mxu0
      %v2323 = vadd.f32 %v2282, %v2322
      %v2324 = vpop.f32.mrb[0].mxu0
      %v2325 = vpop.f32.mrb[0].mxu0
      %v2326 = vadd.f32 %v2285, %v2325
      %v2327 = vpop.f32.mrb[0].mxu0
      %2328 = vdwg.mxu0
      %2329 = vmatprep.subr.bf16.mxu0 0
      %2330 = vmatpush1.bf16.msra.mxu0 %v1695
      %2331 = vmatprep.subr.bf16.mxu0 0
      %2332 = vmatpush1.bf16.msra.mxu0 %v1696
      %2333 = vmatprep.subr.bf16.mxu0 0
      %2334 = vmatpush1.bf16.msra.mxu0 %v1697
      %2335 = vmatprep.subr.bf16.mxu0 0
      %2336 = vmatpush1.bf16.msra.mxu0 %v1698
      %2337 = vmatprep.subr.bf16.mxu0 0
      %2338 = vmatpush1.bf16.msra.mxu0 %v1699
      %2339 = vmatprep.subr.bf16.mxu0 0
      %2340 = vmatpush1.bf16.msra.mxu0 %v1700
      %2341 = vmatprep.subr.bf16.mxu0 0
      %2342 = vmatpush1.bf16.msra.mxu0 %v1701
      %2343 = vmatprep.subr.bf16.mxu0 0
      %2344 = vmatpush1.bf16.msra.mxu0 %v1702
      %2345 = vmatprep.subr.bf16.mxu0 0
      %2346 = vmatpush1.bf16.msra.mxu0 %v1703
      %2347 = vmatprep.subr.bf16.mxu0 0
      %2348 = vmatpush1.bf16.msra.mxu0 %v1704
      %2349 = vmatprep.subr.bf16.mxu0 0
      %2350 = vmatpush1.bf16.msra.mxu0 %v1705
      %2351 = vmatprep.subr.bf16.mxu0 0
      %2352 = vmatpush1.bf16.msra.mxu0 %v1706
      %2353 = vmatprep.subr.bf16.mxu0 0
      %2354 = vmatpush1.bf16.msra.mxu0 %v1707
      %2355 = vmatprep.subr.bf16.mxu0 0
      %2356 = vmatpush1.bf16.msra.mxu0 %v1708
      %2357 = vmatprep.subr.bf16.mxu0 0
      %2358 = vmatpush1.bf16.msra.mxu0 %v1709
      %2359 = vmatprep.subr.bf16.mxu0 0
      %2360 = vmatpush1.bf16.msra.mxu0 %v1710
      %2361 = vmatprep.mubr.bf16.mxu0 %v740
      %2362 = vmatmul.mubr.bf16.gmra.mrb[0].mxu0 %v739
      %v2363 = vpop.f32.mrb[0].mxu0
      %v2364 = vadd.f32 %v2323, %v2363
      %v2365 = vpop.f32.mrb[0].mxu0
      %v2366 = vpop.f32.mrb[0].mxu0
      %v2367 = vadd.f32 %v2326, %v2366
      %v2368 = vpop.f32.mrb[0].mxu0
      %2369 = vdwg.mxu0
      %2370 = vmatprep.subr.bf16.mxu0 0
      %2371 = vmatpush1.bf16.msra.mxu0 %v1711
      %2372 = vmatprep.subr.bf16.mxu0 0
      %2373 = vmatpush1.bf16.msra.mxu0 %v1712
      %2374 = vmatprep.subr.bf16.mxu0 0
      %2375 = vmatpush1.bf16.msra.mxu0 %v1713
      %2376 = vmatprep.subr.bf16.mxu0 0
      %2377 = vmatpush1.bf16.msra.mxu0 %v1714
      %2378 = vmatprep.subr.bf16.mxu0 0
      %2379 = vmatpush1.bf16.msra.mxu0 %v1715
      %2380 = vmatprep.subr.bf16.mxu0 0
      %2381 = vmatpush1.bf16.msra.mxu0 %v1716
      %2382 = vmatprep.subr.bf16.mxu0 0
      %2383 = vmatpush1.bf16.msra.mxu0 %v1717
      %2384 = vmatprep.subr.bf16.mxu0 0
      %2385 = vmatpush1.bf16.msra.mxu0 %v1718
      %2386 = vmatprep.subr.bf16.mxu0 0
      %2387 = vmatpush1.bf16.msra.mxu0 %v1719
      %2388 = vmatprep.subr.bf16.mxu0 0
      %2389 = vmatpush1.bf16.msra.mxu0 %v1720
      %2390 = vmatprep.subr.bf16.mxu0 0
      %2391 = vmatpush1.bf16.msra.mxu0 %v1721
      %2392 = vmatprep.subr.bf16.mxu0 0
      %2393 = vmatpush1.bf16.msra.mxu0 %v1722
      %2394 = vmatprep.subr.bf16.mxu0 0
      %2395 = vmatpush1.bf16.msra.mxu0 %v1723
      %2396 = vmatprep.subr.bf16.mxu0 0
      %2397 = vmatpush1.bf16.msra.mxu0 %v1724
      %2398 = vmatprep.subr.bf16.mxu0 0
      %2399 = vmatpush1.bf16.msra.mxu0 %v1725
      %2400 = vmatprep.subr.bf16.mxu0 0
      %2401 = vmatpush1.bf16.msra.mxu0 %v1726
      %2402 = vmatprep.mubr.bf16.mxu0 %v742
      %2403 = vmatmul.mubr.bf16.gmra.mrb[0].mxu0 %v741
      %v2404 = vpop.f32.mrb[0].mxu0
      %v2405 = vadd.f32 %v2364, %v2404
      %v2406 = vpop.f32.mrb[0].mxu0
      %v2407 = vpop.f32.mrb[0].mxu0
      %v2408 = vadd.f32 %v2367, %v2407
      %v2409 = vpop.f32.mrb[0].mxu0
      %2410 = vdwg.mxu0
      %v2411 = vxor.u32 %v2405, 2147483648
      %v2412 = vxor.u32 %v2408, 2147483648
      %v2413 = vmul.f32 %v2411, 1.442695
      %v2414 = vpow.pop %v2413
      %v2415 = vmul.f32 %v2412, 1.442695
      %v2416 = vpow.pop %v2415
      %v2417 = vadd.f32 %v2414, 1.0
      %v2418 = vadd.f32 %v2416, 1.0
      %v2419 = vrcp.pop %v2417
      %v2420 = vmul.f32 1.0, %v2419
      %v2421 = vrcp.pop %v2418
      %v2422 = vmul.f32 1.0, %v2421
      %v2423 = vmul.f32 %v2405, %v2420
      %v2424 = vmul.f32 %v2408, %v2422
      %v2425 = vpack.c.bf16 %v2424, %v2423
      %v2426 = vld [vmem:[%s3] sm:$0xf]
      %v2427 = vld [vmem:[%s3 + $0x4] sm:$0xf]
      %v2428 = vld [vmem:[%s3 + $0x8] sm:$0xf]
      %v2429 = vld [vmem:[%s3 + $0xc] sm:$0xf]
      %v2430 = vld [vmem:[%s3 + $0x10] sm:$0xf]
      %v2431 = vld [vmem:[%s3 + $0x14] sm:$0xf]
      %v2432 = vld [vmem:[%s3 + $0x18] sm:$0xf]
      %v2433 = vld [vmem:[%s3 + $0x1c] sm:$0xf]
      %v2434 = vld [vmem:[%s3 + $0x20] sm:$0xf]
      %v2435 = vld [vmem:[%s3 + $0x24] sm:$0xf]
      %v2436 = vld [vmem:[%s3 + $0x28] sm:$0xf]
      %v2437 = vld [vmem:[%s3 + $0x2c] sm:$0xf]
      %v2438 = vld [vmem:[%s3 + $0x30] sm:$0xf]
      %v2439 = vld [vmem:[%s3 + $0x34] sm:$0xf]
      %v2440 = vld [vmem:[%s3 + $0x38] sm:$0xf]
      %v2441 = vld [vmem:[%s3 + $0x3c] sm:$0xf]
      %v2442 = vld [vmem:[%s4] sm:$0x1]
      %v2444 = vlaneseq
      %v2445 = vshrl.u32 %v2444, 7
      %v2446 = vsub.s32 0, %v2445
      %v2447 = vrot.slane %v2442, %v2446
      %v2465 = vunpack.c.l.b16 %v2426
      %v2466 = vunpack.c.l.b16 %v2427
      %v2467 = vunpack.c.l.b16 %v2428
      %v2468 = vunpack.c.l.b16 %v2429
      %v2469 = vunpack.c.l.b16 %v2430
      %v2470 = vunpack.c.l.b16 %v2431
      %v2471 = vunpack.c.l.b16 %v2432
      %v2472 = vunpack.c.l.b16 %v2433
      %v2473 = vunpack.c.l.b16 %v2434
      %v2474 = vunpack.c.l.b16 %v2435
      %v2475 = vunpack.c.l.b16 %v2436
      %v2476 = vunpack.c.l.b16 %v2437
      %v2477 = vunpack.c.l.b16 %v2438
      %v2478 = vunpack.c.l.b16 %v2439
      %v2479 = vunpack.c.l.b16 %v2440
      %v2480 = vunpack.c.l.b16 %v2441
      %v2481 = vpack.c.b16 %v2466, %v2465
      %v2482 = vpack.c.b16 %v2468, %v2467
      %v2483 = vpack.c.b16 %v2470, %v2469
      %v2484 = vpack.c.b16 %v2472, %v2471
      %v2485 = vpack.c.b16 %v2474, %v2473
      %v2486 = vpack.c.b16 %v2476, %v2475
      %v2487 = vpack.c.b16 %v2478, %v2477
      %v2488 = vpack.c.b16 %v2480, %v2479
      %2497 = vmatprep.subr.bf16.mxu0 0
      %2498 = vmatpush1.bf16.msra.mxu0 %v2481
      %2499 = vmatprep.subr.bf16.mxu0 0
      %2500 = vmatpush1.bf16.msra.mxu0 %v2482
      %2501 = vmatprep.subr.bf16.mxu0 0
      %2502 = vmatpush1.bf16.msra.mxu0 %v2483
      %2503 = vmatprep.subr.bf16.mxu0 0
      %2504 = vmatpush1.bf16.msra.mxu0 %v2484
      %2505 = vmatprep.subr.bf16.mxu0 0
      %2506 = vmatpush1.bf16.msra.mxu0 %v2485
      %2507 = vmatprep.subr.bf16.mxu0 0
      %2508 = vmatpush1.bf16.msra.mxu0 %v2486
      %2509 = vmatprep.subr.bf16.mxu0 0
      %2510 = vmatpush1.bf16.msra.mxu0 %v2487
      %2511 = vmatprep.subr.bf16.mxu0 0
      %2512 = vmatpush1.bf16.msra.mxu0 %v2488
      %2513 = vmatprep.subr.bf16.mxu0 0
      %2514 = vmatpush1.bf16.msra.mxu0 0
      %2515 = vmatprep.subr.bf16.mxu0 0
      %2516 = vmatpush1.bf16.msra.mxu0 0
      %2517 = vmatprep.subr.bf16.mxu0 0
      %2518 = vmatpush1.bf16.msra.mxu0 0
      %2519 = vmatprep.subr.bf16.mxu0 0
      %2520 = vmatpush1.bf16.msra.mxu0 0
      %2521 = vmatprep.subr.bf16.mxu0 0
      %2522 = vmatpush1.bf16.msra.mxu0 0
      %2523 = vmatprep.subr.bf16.mxu0 0
      %2524 = vmatpush1.bf16.msra.mxu0 0
      %2525 = vmatprep.subr.bf16.mxu0 0
      %2526 = vmatpush1.bf16.msra.mxu0 0
      %2527 = vmatprep.subr.bf16.mxu0 0
      %2528 = vmatpush1.bf16.msra.mxu0 0
      %2529 = vmatprep.mubr.bf16.mxu0 0
      %2530 = vmatmul.mubr.bf16.gmra.mrb[0].mxu0 %v2425
      %v2531 = vpop.f32.mrb[0].mxu0
      %v2532 = vadd.f32 %v2447, %v2531
      %v2533 = vpop.f32.mrb[0].mxu0
      %v2534 = vpop.f32.mrb[0].mxu0
      %v2535 = vadd.f32 %v2447, %v2534
      %v2536 = vpop.f32.mrb[0].mxu0
      %2537 = vdwg.mxu0
      %v2538 = vxor.u32 %v2532, 2147483648
      %v2539 = vxor.u32 %v2535, 2147483648
      %v2540 = vmul.f32 %v2538, 1.442695
      %v2541 = vpow.pop %v2540
      %v2542 = vmul.f32 %v2539, 1.442695
      %v2543 = vpow.pop %v2542
      %v2544 = vadd.f32 %v2541, 1.0
      %v2545 = vadd.f32 %v2543, 1.0
      %v2546 = vrcp.pop %v2544
      %v2547 = vmul.f32 1.0, %v2546
      %v2548 = vrcp.pop %v2545
      %v2549 = vmul.f32 1.0, %v2548
      %v2550 = vpack.c.bf16 %v2549, %v2547
      %v2552 = vunpack.c.l.b16 %v2550
      %v2553 = vunpack.c.h.b16 %v2550
      %v2554 = vpack.c.b16 %v2552, %v2552
      %v2555 = vpack.c.b16 %v2553, %v2553
      %2558 = vst [vmem:[%s229] sm:$0xf] %v2554
      %2559 = vst [vmem:[%s229 + $0x4] sm:$0xf] %v2555
      %s2560 = smul.u32 2, %s16
      %p2561 = scmp.lt.s32.totalorder %s2560, 3
      %s2562 = scalar_select %p2561, %s2560, 3
      %s2563 = smul.addr %s2562, 4
      %s2564 = scalar_lea.vmem %s5, %s2563
      // Predicated region
      $region41: #{_forward_impl.1} parent=39 // pred_check
        %p2565 = pneg %p144
      $region42: #{_forward_impl.1} parent=39 // pred_check_branch
        %2567 = sbr.rel (%p2565) target = $region44
      $region43: #{_forward_impl.1} parent=39 // pred_region
        %s2568 = smul.u32 2, %s16
      $region44: #{_forward_impl.1} parent=39 // pred_fallthru
        _
    $region40: #{_forward_impl.1} parent=5 // pred_fallthru
      _
    %p2569 = scmp.le.s32.totalorder 2, %s11
    // Predicated region
    $region45: #{_forward_impl.1} parent=5 // pred_check
      %p2570 = pneg %p2569
    $region46: #{_forward_impl.1} parent=5 // pred_check_branch
      %2572 = sbr.rel (%p2570) target = $region48
    $region47: #{_forward_impl.1} parent=5 // pred_region
      %s2573 = ssub.s32 %s11, 2
      // Predicated region
      $region49: #{_forward_impl.1} parent=47 // pred_check
        %p2574 = pneg %p150
      $region50: #{_forward_impl.1} parent=47 // pred_check_branch
        %2576 = sbr.rel (%p2574) target = $region52
      $region51: #{_forward_impl.1} parent=47 // pred_region
        %s2577 = smul.u32 2, %s17
        %p2578 = scmp.lt.s32.totalorder %s2577, 3
        %s2579 = scalar_select %p2578, %s2577, 3
        %s2580 = smul.addr %s2579, 4
        %s2581 = scalar_lea.vmem %s5, %s2580
      $region52: #{_forward_impl.1} parent=47 // pred_fallthru
        _
    $region48: #{_forward_impl.1} parent=5 // pred_fallthru
      _
  $region6: #{_forward_impl.1} parent=0 // loop_footer
    %s15 = sadd.s32 1, %s11
  $region7: #{_forward_impl.1} parent=0 // loop_footer_branch
    %10 = sbr.rel target = $region3
  $region8: #{_forward_impl.1} parent=0 // loop_exit
    _

</llo_original>
